<compile_context>
chip_gen: v6e
topology: v6e:2x2x1
jax: 0.10.0
libtpu: 0.0.40
codegen_flags: <defaults>
</compile_context>

<pallas_src>
import functools

import jax
import jax.numpy as jnp
from jax.experimental import pallas as pl
from jax.experimental.pallas import tpu as pltpu

# Logical layer sizes (from the PyTorch module) and padded output width.
K_IN, H1, H2, N_OUT = 1000, 512, 256, 4
N_PAD = 128                       # lane-dense output width (real logits in cols 0..3)
TM_MAX = 512                      # max batch tile (rows per grid step)


def _round_up(n, m):
    return (n + m - 1) // m * m


def _cdiv(a, b):
    return (a + b - 1) // b


def _choose_tm(b):
    """Batch tile size: multiple of 16 for small B, >=2 full-ish tiles otherwise."""
    if b <= 256:
        return _round_up(max(b, 1), 16)
    # >= 2 tiles so v7x megacore ("parallel" batch axis) keeps both TCs busy;
    # tiles are multiples of 128 to keep the MXU M dimension full.
    n_tiles = max(2, _cdiv(b, TM_MAX))
    return min(TM_MAX, _round_up(_cdiv(b, n_tiles), 128))


def _vmem_budget(tm):
    """Tight-but-safe scoped-VMEM budget computed from the tile size."""
    x_bytes = 2 * tm * K_IN * 4                                   # x tile, double-buffered (f32)
    w_bytes = 2 * ((K_IN * H1 + H1 * H2 + H2 * N_PAD) * 2          # bf16 weights (2 bufs)
                   + (H1 + H2 + N_PAD) * 4)                        # f32 biases (2 bufs)
    out_bytes = 2 * tm * N_PAD * 2                                 # bf16 out tile (2 bufs)
    tmp_bytes = tm * (K_IN * 2 + H1 * 6 + H2 * 6 + N_PAD * 4)      # in-kernel temporaries
    budget = int(1.5 * (x_bytes + w_bytes + out_bytes + tmp_bytes))
    return min(64 * 1024 * 1024, max(16 * 1024 * 1024, budget))


def _mlp_head_kernel(x_ref, w1_ref, b1_ref, w2_ref, b2_ref, w3_ref, b3_ref,
                     out_ref):
    # In-kernel f32 -> bf16 cast (rides idle VPU slots; halves MXU input width).
    x = x_ref[...].astype(jnp.bfloat16)
    # Layer 1: Linear(1000 -> 512) + bias + ReLU   (bf16 in, f32 MXU accumulate)
    h1 = jnp.dot(x, w1_ref[...], preferred_element_type=jnp.float32)
    h1 = jnp.maximum(h1 + b1_ref[...], 0.0).astype(jnp.bfloat16)
    # Dropout (eval mode) == identity
    # Layer 2: Linear(512 -> 256) + bias + ReLU
    h2 = jnp.dot(h1, w2_ref[...], preferred_element_type=jnp.float32)
    h2 = jnp.maximum(h2 + b2_ref[...], 0.0).astype(jnp.bfloat16)
    # Dropout (eval mode) == identity
    # Layer 3: Linear(256 -> 128-padded) + bias (real logits live in cols 0..3)
    h3 = jnp.dot(h2, w3_ref[...], preferred_element_type=jnp.float32)
    out_ref[...] = (h3 + b3_ref[...]).astype(out_ref.dtype)


@functools.partial(jax.jit, static_argnames=())
def fc_rotation_forward(x, packed):
    """Fused, batch-tiled MLP head.

    x: (B, 1000) float32 flattened features (fed to the kernel un-padded, f32).
    packed: dict of bf16 weights / f32 biases (see pack_params).
    Returns: (B, 4) float32 rotation logits.
    """
    B = x.shape[0]
    tm = _choose_tm(B)
    b_pad = _round_up(B, tm)
    grid = (b_pad // tm,)

    # Only pad the batch (f32, no dtype cast / no K pad) when B is not a tile
    # multiple; in the common full-tile case x goes straight into the kernel.
    if b_pad != B:
        x = jnp.pad(x, ((0, b_pad - B), (0, 0)))

    w1, b1 = packed["w1"], packed["b1"]
    w2, b2 = packed["w2"], packed["b2"]
    w3, b3 = packed["w3"], packed["b3"]

    flops = 2 * b_pad * (K_IN * H1 + H1 * H2 + H2 * N_PAD)
    bytes_accessed = (
        b_pad * K_IN * 4                                   # x (f32 read)
        + (w1.size + w2.size + w3.size) * 2                # bf16 weights
        + (b1.size + b2.size + b3.size) * 4                # f32 biases
        + b_pad * N_PAD * 2                                # bf16 output writeback
    )

    out_padded = pl.pallas_call(
        _mlp_head_kernel,
        out_shape=jax.ShapeDtypeStruct((b_pad, N_PAD), jnp.bfloat16),
        grid=grid,
        in_specs=[
            pl.BlockSpec((tm, K_IN), lambda i: (i, 0)),        # x tile (pipelined, f32)
            pl.BlockSpec((K_IN, H1), lambda i: (0, 0)),        # w1 (VMEM-resident)
            pl.BlockSpec((1, H1), lambda i: (0, 0)),           # b1
            pl.BlockSpec((H1, H2), lambda i: (0, 0)),          # w2
            pl.BlockSpec((1, H2), lambda i: (0, 0)),           # b2
            pl.BlockSpec((H2, N_PAD), lambda i: (0, 0)),       # w3 (padded N)
            pl.BlockSpec((1, N_PAD), lambda i: (0, 0)),        # b3 (padded N)
        ],
        out_specs=pl.BlockSpec((tm, N_PAD), lambda i: (i, 0)),
        compiler_params=pltpu.CompilerParams(
            dimension_semantics=("parallel",),   # shard batch tiles across TCs (v7x)
            vmem_limit_bytes=_vmem_budget(tm),
        ),
        cost_estimate=pl.CostEstimate(
            flops=flops, transcendentals=0, bytes_accessed=bytes_accessed),
    )(x, w1, b1, w2, b2, w3, b3)

    # Strip batch padding and the 4 -> 128 output padding; return f32 logits.
    return out_padded[:B, :N_OUT].astype(jnp.float32)


def _kaiming_normal(key, fan_in, fan_out):
    # torch.nn.init.kaiming_normal default: fan_in mode, gain = sqrt(2).
    # Stored transposed as (in, out) so the kernel computes x @ W.
    std = jnp.sqrt(2.0 / fan_in)
    return jax.random.normal(key, (fan_in, fan_out), dtype=jnp.float32) * std


def init_params(key):
    """Logical (unpadded, f32) parameters matching the PyTorch module."""
    k1, k2, k3 = jax.random.split(key, 3)
    return {
        "w1": _kaiming_normal(k1, K_IN, H1),
        "b1": jnp.zeros((1, H1), jnp.float32),
        "w2": _kaiming_normal(k2, H1, H2),
        "b2": jnp.zeros((1, H2), jnp.float32),
        "w3": _kaiming_normal(k3, H2, N_OUT),
        "b3": jnp.zeros((1, N_OUT), jnp.float32),
    }


def pack_params(params):
    """One-time packing: cast weights to bf16, pad only the tiny N 4->128."""
    w3 = jnp.zeros((H2, N_PAD), jnp.bfloat16).at[:, :N_OUT].set(
        params["w3"].astype(jnp.bfloat16))
    b3 = jnp.zeros((1, N_PAD), jnp.float32).at[:, :N_OUT].set(params["b3"])
    return {
        "w1": params["w1"].astype(jnp.bfloat16),    # (1000, 512), no K padding
        "b1": params["b1"],                          # biases stay f32 (added post-acc)
        "w2": params["w2"].astype(jnp.bfloat16),
        "b2": params["b2"],
        "w3": w3,
        "b3": b3,
    }


def model_forward(x, packed):
    # features backbone is None in the reference module; input is already the
    # flattened 1000-dim feature vector, matching `x.view(x.size(0), -1)`.
    x_flat = x.reshape(x.shape[0], -1)
    return fc_rotation_forward(x_flat, packed)


if __name__ == "__main__":
    key = jax.random.PRNGKey(0)
    pkey, xkey = jax.random.split(key)
    params = init_params(pkey)
    packed = pack_params(params)

    B = 2
    x = jax.random.normal(xkey, (B, K_IN), dtype=jnp.float32)

    rotation = model_forward(x, packed)
    rotation = jax.block_until_ready(rotation)

    assert rotation.shape == (B, N_OUT)
    assert rotation.dtype == jnp.float32
    assert bool(jnp.all(jnp.isfinite(rotation)))

    # Sanity check vs a plain-JAX f32 reference (bf16 matmul drift tolerated).
    def ref(xf, p):
        h = jnp.maximum(xf @ p["w1"] + p["b1"], 0.0)
        h = jnp.maximum(h @ p["w2"] + p["b2"], 0.0)
        return h @ p["w3"] + p["b3"]

    expected = ref(x, params)
    err = jnp.max(jnp.abs(rotation - expected)) / (jnp.max(jnp.abs(expected)) + 1e-6)
    assert float(err) < 5e-2, f"relative error too large: {float(err)}"

    print("KERNEL_OK")
</pallas_src>

<mosaic_0001>
module attributes {stable_mosaic.version = 11 : i64} {
  func.func @_mlp_head_kernel(%arg0: i32, %arg1: memref<16x1000xf32, #tpu.memory_space<vmem>>, %arg2: memref<1000x512xbf16, #tpu.memory_space<vmem>>, %arg3: memref<1x512xf32, #tpu.memory_space<vmem>>, %arg4: memref<512x256xbf16, #tpu.memory_space<vmem>>, %arg5: memref<1x256xf32, #tpu.memory_space<vmem>>, %arg6: memref<256x128xbf16, #tpu.memory_space<vmem>>, %arg7: memref<1x128xf32, #tpu.memory_space<vmem>>, %arg8: memref<16x128xbf16, #tpu.memory_space<vmem>>) attributes {dimension_semantics = [#tpu.dimension_semantics<parallel>], iteration_bounds = array<i64: 1>, scalar_prefetch = 0 : i64, scratch_operands = 0 : i64, tpu.core_type = #tpu.core_type<tc>, window_params = [{transform_indices = @transform_0, window_bounds = array<i64: 16, 1000>}, {pipeline_mode = #tpu.pipeline_mode<synchronous>, transform_indices = @transform_1, window_bounds = array<i64: 1000, 512>}, {pipeline_mode = #tpu.pipeline_mode<synchronous>, transform_indices = @transform_2, window_bounds = array<i64: 1, 512>}, {pipeline_mode = #tpu.pipeline_mode<synchronous>, transform_indices = @transform_3, window_bounds = array<i64: 512, 256>}, {pipeline_mode = #tpu.pipeline_mode<synchronous>, transform_indices = @transform_4, window_bounds = array<i64: 1, 256>}, {pipeline_mode = #tpu.pipeline_mode<synchronous>, transform_indices = @transform_5, window_bounds = array<i64: 256, 128>}, {pipeline_mode = #tpu.pipeline_mode<synchronous>, transform_indices = @transform_6, window_bounds = array<i64: 1, 128>}, {transform_indices = @transform_7, window_bounds = array<i64: 16, 128>}]} {
    %c0 = arith.constant 0 : index
    %c0_0 = arith.constant 0 : index
    %0 = vector.load %arg1[%c0, %c0_0] : memref<16x1000xf32, #tpu.memory_space<vmem>>, vector<16x1000xf32>
    %1 = arith.truncf %0 : vector<16x1000xf32> to vector<16x1000xbf16>
    %c0_1 = arith.constant 0 : index
    %c0_2 = arith.constant 0 : index
    %2 = vector.load %arg2[%c0_1, %c0_2] : memref<1000x512xbf16, #tpu.memory_space<vmem>>, vector<1000x512xbf16>
    %cst = arith.constant dense<0.000000e+00> : vector<16x512xf32>
    %3 = tpu.matmul %1, %2, %cst {dimension_numbers = #tpu.dot_dimension_numbers<[1], [0], [0], [1], [0, 0, 1, 1], [], []>} : vector<16x1000xbf16>, vector<1000x512xbf16>, vector<16x512xf32> -> vector<16x512xf32>
    %c0_3 = arith.constant 0 : index
    %c0_4 = arith.constant 0 : index
    %4 = vector.load %arg3[%c0_3, %c0_4] : memref<1x512xf32, #tpu.memory_space<vmem>>, vector<1x512xf32>
    %5 = vector.broadcast %4 : vector<1x512xf32> to vector<16x512xf32>
    %6 = arith.addf %3, %5 : vector<16x512xf32>
    %cst_5 = arith.constant 0.000000e+00 : f32
    %7 = vector.broadcast %cst_5 : f32 to vector<16x512xf32>
    %8 = arith.maximumf %6, %7 : vector<16x512xf32>
    %9 = arith.truncf %8 : vector<16x512xf32> to vector<16x512xbf16>
    %c0_6 = arith.constant 0 : index
    %c0_7 = arith.constant 0 : index
    %10 = vector.load %arg4[%c0_6, %c0_7] : memref<512x256xbf16, #tpu.memory_space<vmem>>, vector<512x256xbf16>
    %cst_8 = arith.constant dense<0.000000e+00> : vector<16x256xf32>
    %11 = tpu.matmul %9, %10, %cst_8 {dimension_numbers = #tpu.dot_dimension_numbers<[1], [0], [0], [1], [0, 0, 1, 1], [], []>} : vector<16x512xbf16>, vector<512x256xbf16>, vector<16x256xf32> -> vector<16x256xf32>
    %c0_9 = arith.constant 0 : index
    %c0_10 = arith.constant 0 : index
    %12 = vector.load %arg5[%c0_9, %c0_10] : memref<1x256xf32, #tpu.memory_space<vmem>>, vector<1x256xf32>
    %13 = vector.broadcast %12 : vector<1x256xf32> to vector<16x256xf32>
    %14 = arith.addf %11, %13 : vector<16x256xf32>
    %cst_11 = arith.constant 0.000000e+00 : f32
    %15 = vector.broadcast %cst_11 : f32 to vector<16x256xf32>
    %16 = arith.maximumf %14, %15 : vector<16x256xf32>
    %17 = arith.truncf %16 : vector<16x256xf32> to vector<16x256xbf16>
    %c0_12 = arith.constant 0 : index
    %c0_13 = arith.constant 0 : index
    %18 = vector.load %arg6[%c0_12, %c0_13] : memref<256x128xbf16, #tpu.memory_space<vmem>>, vector<256x128xbf16>
    %cst_14 = arith.constant dense<0.000000e+00> : vector<16x128xf32>
    %19 = tpu.matmul %17, %18, %cst_14 {dimension_numbers = #tpu.dot_dimension_numbers<[1], [0], [0], [1], [0, 0, 1, 1], [], []>} : vector<16x256xbf16>, vector<256x128xbf16>, vector<16x128xf32> -> vector<16x128xf32>
    %c0_15 = arith.constant 0 : index
    %c0_16 = arith.constant 0 : index
    %20 = vector.load %arg7[%c0_15, %c0_16] : memref<1x128xf32, #tpu.memory_space<vmem>>, vector<1x128xf32>
    %21 = vector.broadcast %20 : vector<1x128xf32> to vector<16x128xf32>
    %22 = arith.addf %19, %21 : vector<16x128xf32>
    %23 = arith.truncf %22 : vector<16x128xf32> to vector<16x128xbf16>
    %c0_17 = arith.constant 0 : index
    %c0_18 = arith.constant 0 : index
    %24 = vector.load %arg8[%c0_17, %c0_18] : memref<16x128xbf16, #tpu.memory_space<vmem>>, vector<16x128xbf16>
    tpu.vector_store %arg8[%c0_17, %c0_18], %23 {strides = array<i32>} : memref<16x128xbf16, #tpu.memory_space<vmem>>, vector<16x128xbf16>,
    return
  }
  func.func @transform_0(%arg0: i32) -> (i32, i32) {
    %c0_i32 = arith.constant 0 : i32
    %c0_i32_0 = arith.constant 0 : i32
    return %arg0, %c0_i32 : i32, i32
  }
  func.func @transform_1(%arg0: i32) -> (i32, i32) {
    %c0_i32 = arith.constant 0 : i32
    %c0_i32_0 = arith.constant 0 : i32
    %c0_i32_1 = arith.constant 0 : i32
    return %c0_i32, %c0_i32_0 : i32, i32
  }
  func.func @transform_2(%arg0: i32) -> (i32, i32) {
    %c0_i32 = arith.constant 0 : i32
    %c0_i32_0 = arith.constant 0 : i32
    %c0_i32_1 = arith.constant 0 : i32
    return %c0_i32, %c0_i32_0 : i32, i32
  }
  func.func @transform_3(%arg0: i32) -> (i32, i32) {
    %c0_i32 = arith.constant 0 : i32
    %c0_i32_0 = arith.constant 0 : i32
    %c0_i32_1 = arith.constant 0 : i32
    return %c0_i32, %c0_i32_0 : i32, i32
  }
  func.func @transform_4(%arg0: i32) -> (i32, i32) {
    %c0_i32 = arith.constant 0 : i32
    %c0_i32_0 = arith.constant 0 : i32
    %c0_i32_1 = arith.constant 0 : i32
    return %c0_i32, %c0_i32_0 : i32, i32
  }
  func.func @transform_5(%arg0: i32) -> (i32, i32) {
    %c0_i32 = arith.constant 0 : i32
    %c0_i32_0 = arith.constant 0 : i32
    %c0_i32_1 = arith.constant 0 : i32
    return %c0_i32, %c0_i32_0 : i32, i32
  }
  func.func @transform_6(%arg0: i32) -> (i32, i32) {
    %c0_i32 = arith.constant 0 : i32
    %c0_i32_0 = arith.constant 0 : i32
    %c0_i32_1 = arith.constant 0 : i32
    return %c0_i32, %c0_i32_0 : i32, i32
  }
  func.func @transform_7(%arg0: i32) -> (i32, i32) {
    %c0_i32 = arith.constant 0 : i32
    %c0_i32_0 = arith.constant 0 : i32
    return %arg0, %c0_i32 : i32, i32
  }
}

</mosaic_0001>

<llo_original>
// kernel: fc_rotation_forward.1
$region0: #{fc_rotation_forward.1}
  #allocation0 [shape = 'u32[]', space=smem, size = 0x4, offset = 0x4, fixed_abs, tag = 'smem constant byte address 0x4 - core index']
  #allocation1 [shape = 'u32[144,128]{1,0:T(1,128)}', space=vmem, size = 0x12000, scoped, tag = 'internal scratch']
  %s0 = inlined_call_operand.vmem [shape: f32[16,1000], index: 0, kind: input, shape index: {}]
  %s1 = inlined_call_operand.hbm [shape: bf16[1000,512], index: 1, kind: input, shape index: {}]
  %s2 = inlined_call_operand.vmem [shape: f32[1,512], index: 2, kind: input, shape index: {}]
  %s3 = inlined_call_operand.hbm [shape: bf16[512,256], index: 3, kind: input, shape index: {}]
  %s4 = inlined_call_operand.vmem [shape: f32[1,256], index: 4, kind: input, shape index: {}]
  %s5 = inlined_call_operand.vmem [shape: bf16[256,128], index: 5, kind: input, shape index: {}]
  %s6 = inlined_call_operand.vmem [shape: f32[1,128], index: 6, kind: input, shape index: {}]
  %s7 = inlined_call_operand.vmem [shape: bf16[16,128], index: 7, kind: output, shape index: {}]
  %s8 = sld [smem:[#allocation0]]
  $region46: #{fc_rotation_forward.1} parent=0
    _
  %s10 = ssub.s32 1, %s8
  %s11 = scalar_select 0, %s10, %s8
  $region1: #{fc_rotation_forward.1} parent=0
    #allocation2 [shape = 'u8[1024000]{0}', space=vmem, size = 0xfa000, scoped, tag = 'input window, operand 1, single buffered']
    #allocation3 [shape = 's32[1]{0}', space=sflag, size = 0x4, scoped, tag = 'scoped memory for fc_rotation_forward.1']
    #allocation4 [shape = 'u8[262144]{0}', space=vmem, size = 0x40000, scoped, tag = 'input window, operand 3, single buffered']
    #allocation5 [shape = 's32[1]{0}', space=sflag, size = 0x4, scoped, tag = 'scoped memory for fc_rotation_forward.1']
    %12 = vsyncpa [#allocation3], 0
    %13 = vsyncpa [#allocation5], 0
    // Predicated region
    $region2: #{fc_rotation_forward.1} parent=1 // pred_check
      _
    $region3: #{fc_rotation_forward.1} parent=1 // pred_check_branch
      %15 = sbr.rel (0) target = $region5
    $region4: #{fc_rotation_forward.1} parent=1 // pred_region
      _
    $region5: #{fc_rotation_forward.1} parent=1 // pred_fallthru
      _
    // Predicated region
    $region6: #{fc_rotation_forward.1} parent=1 // pred_check
      _
    $region7: #{fc_rotation_forward.1} parent=1 // pred_check_branch
      %17 = sbr.rel (0) target = $region9
    $region8: #{fc_rotation_forward.1} parent=1 // pred_region
      %s19 = ssub.s32 32000, 32000
      %20 = vsyncadd [#allocation3], %s19
      %s21 = sshll.u32 [#allocation2], 4
      %s22 = int_to_ptr.vmem [resolvable:$true] %s21
      %27 = dma.hbm_to_vmem [thread:$0]  %s1, 32000, %s22, [#allocation3], 256, 256, 16
    $region9: #{fc_rotation_forward.1} parent=1 // pred_fallthru
      _
    // Predicated region
    $region10: #{fc_rotation_forward.1} parent=1 // pred_check
      _
    $region11: #{fc_rotation_forward.1} parent=1 // pred_check_branch
      %29 = sbr.rel (0) target = $region13
    $region12: #{fc_rotation_forward.1} parent=1 // pred_region
      _
    $region13: #{fc_rotation_forward.1} parent=1 // pred_fallthru
      _
    // Predicated region
    $region14: #{fc_rotation_forward.1} parent=1 // pred_check
      _
    $region15: #{fc_rotation_forward.1} parent=1 // pred_check_branch
      %31 = sbr.rel (0) target = $region17
    $region16: #{fc_rotation_forward.1} parent=1 // pred_region
      %s33 = ssub.s32 8192, 8192
      %34 = vsyncadd [#allocation5], %s33
      %s35 = sshll.u32 [#allocation4], 4
      %s36 = int_to_ptr.vmem [resolvable:$true] %s35
      %41 = dma.hbm_to_vmem [thread:$0]  %s3, 8192, %s36, [#allocation5], 128, 128, 8
    $region17: #{fc_rotation_forward.1} parent=1 // pred_fallthru
      _
    // Predicated region
    $region18: #{fc_rotation_forward.1} parent=1 // pred_check
      _
    $region19: #{fc_rotation_forward.1} parent=1 // pred_check_branch
      %43 = sbr.rel (0) target = $region21
    $region20: #{fc_rotation_forward.1} parent=1 // pred_region
      _
    $region21: #{fc_rotation_forward.1} parent=1 // pred_fallthru
      _
    // Predicated region
    $region22: #{fc_rotation_forward.1} parent=1 // pred_check
      _
    $region23: #{fc_rotation_forward.1} parent=1 // pred_check_branch
      %45 = sbr.rel (0) target = $region25
    $region24: #{fc_rotation_forward.1} parent=1 // pred_region
      _
    $region25: #{fc_rotation_forward.1} parent=1 // pred_fallthru
      _
    // Predicated region
    $region26: #{fc_rotation_forward.1} parent=1 // pred_check
      _
    $region27: #{fc_rotation_forward.1} parent=1 // pred_check_branch
      %47 = sbr.rel (0) target = $region29
    $region28: #{fc_rotation_forward.1} parent=1 // pred_region
      _
    $region29: #{fc_rotation_forward.1} parent=1 // pred_fallthru
      _
    // Predicated region
    $region30: #{fc_rotation_forward.1} parent=1 // pred_check
      _
    $region31: #{fc_rotation_forward.1} parent=1 // pred_check_branch
      %49 = sbr.rel (0) target = $region33
    $region32: #{fc_rotation_forward.1} parent=1 // pred_region
      %50 = dma.done [#allocation3], 32000
    $region33: #{fc_rotation_forward.1} parent=1 // pred_fallthru
      _
    // Predicated region
    $region34: #{fc_rotation_forward.1} parent=1 // pred_check
      _
    $region35: #{fc_rotation_forward.1} parent=1 // pred_check_branch
      %52 = sbr.rel (0) target = $region37
    $region36: #{fc_rotation_forward.1} parent=1 // pred_region
      %53 = dma.done [#allocation5], 8192
    $region37: #{fc_rotation_forward.1} parent=1 // pred_fallthru
      _
    %v55 = vld [vmem:[%s0] sm:$0xff]
    %v56 = vld [vmem:[%s0 + $0x8] sm:$0xff]
    %v57 = vld [vmem:[%s0 + $0x10] sm:$0xff]
    %v58 = vld [vmem:[%s0 + $0x18] sm:$0xff]
    %v59 = vld [vmem:[%s0 + $0x20] sm:$0xff]
    %v60 = vld [vmem:[%s0 + $0x28] sm:$0xff]
    %v61 = vld [vmem:[%s0 + $0x30] sm:$0xff]
    %v62 = vld [vmem:[%s0 + $0x38] sm:$0xff]
    %v63 = vld [vmem:[%s0 + $0x40] sm:$0xff]
    %v64 = vld [vmem:[%s0 + $0x48] sm:$0xff]
    %v65 = vld [vmem:[%s0 + $0x50] sm:$0xff]
    %v66 = vld [vmem:[%s0 + $0x58] sm:$0xff]
    %v67 = vld [vmem:[%s0 + $0x60] sm:$0xff]
    %v68 = vld [vmem:[%s0 + $0x68] sm:$0xff]
    %v69 = vld [vmem:[%s0 + $0x70] sm:$0xff]
    %v70 = vld [vmem:[%s0 + $0x78] sm:$0xff]
    %v71 = vpack.c.bf16 %v63, %v55
    %v72 = vpack.c.bf16 %v64, %v56
    %v73 = vpack.c.bf16 %v65, %v57
    %v74 = vpack.c.bf16 %v66, %v58
    %v75 = vpack.c.bf16 %v67, %v59
    %v76 = vpack.c.bf16 %v68, %v60
    %v77 = vpack.c.bf16 %v69, %v61
    %v78 = vpack.c.bf16 %v70, %v62
    %v79 = vld [vmem:[#allocation2] sm:$0xff]
    %v80 = vld [vmem:[#allocation2 + $0x8] sm:$0xff]
    %v81 = vld [vmem:[#allocation2 + $0x10] sm:$0xff]
    %v82 = vld [vmem:[#allocation2 + $0x18] sm:$0xff]
    %v83 = vld [vmem:[#allocation2 + $0x20] sm:$0xff]
    %v84 = vld [vmem:[#allocation2 + $0x28] sm:$0xff]
    %v85 = vld [vmem:[#allocation2 + $0x30] sm:$0xff]
    %v86 = vld [vmem:[#allocation2 + $0x38] sm:$0xff]
    %v87 = vld [vmem:[#allocation2 + $0x40] sm:$0xff]
    %v88 = vld [vmem:[#allocation2 + $0x48] sm:$0xff]
    %v89 = vld [vmem:[#allocation2 + $0x50] sm:$0xff]
    %v90 = vld [vmem:[#allocation2 + $0x58] sm:$0xff]
    %v91 = vld [vmem:[#allocation2 + $0x60] sm:$0xff]
    %v92 = vld [vmem:[#allocation2 + $0x68] sm:$0xff]
    %v93 = vld [vmem:[#allocation2 + $0x70] sm:$0xff]
    %v94 = vld [vmem:[#allocation2 + $0x78] sm:$0xff]
    %v95 = vld [vmem:[#allocation2 + $0x80] sm:$0xff]
    %v96 = vld [vmem:[#allocation2 + $0x88] sm:$0xff]
    %v97 = vld [vmem:[#allocation2 + $0x90] sm:$0xff]
    %v98 = vld [vmem:[#allocation2 + $0x98] sm:$0xff]
    %v99 = vld [vmem:[#allocation2 + $0xa0] sm:$0xff]
    %v100 = vld [vmem:[#allocation2 + $0xa8] sm:$0xff]
    %v101 = vld [vmem:[#allocation2 + $0xb0] sm:$0xff]
    %v102 = vld [vmem:[#allocation2 + $0xb8] sm:$0xff]
    %v103 = vld [vmem:[#allocation2 + $0xc0] sm:$0xff]
    %v104 = vld [vmem:[#allocation2 + $0xc8] sm:$0xff]
    %v105 = vld [vmem:[#allocation2 + $0xd0] sm:$0xff]
    %v106 = vld [vmem:[#allocation2 + $0xd8] sm:$0xff]
    %v107 = vld [vmem:[#allocation2 + $0xe0] sm:$0xff]
    %v108 = vld [vmem:[#allocation2 + $0xe8] sm:$0xff]
    %v109 = vld [vmem:[#allocation2 + $0xf0] sm:$0xff]
    %v110 = vld [vmem:[#allocation2 + $0xf8] sm:$0xff]
    %v111 = vld [vmem:[#allocation2 + $0x100] sm:$0xff]
    %v112 = vld [vmem:[#allocation2 + $0x108] sm:$0xff]
    %v113 = vld [vmem:[#allocation2 + $0x110] sm:$0xff]
    %v114 = vld [vmem:[#allocation2 + $0x118] sm:$0xff]
    %v115 = vld [vmem:[#allocation2 + $0x120] sm:$0xff]
    %v116 = vld [vmem:[#allocation2 + $0x128] sm:$0xff]
    %v117 = vld [vmem:[#allocation2 + $0x130] sm:$0xff]
    %v118 = vld [vmem:[#allocation2 + $0x138] sm:$0xff]
    %v119 = vld [vmem:[#allocation2 + $0x140] sm:$0xff]
    %v120 = vld [vmem:[#allocation2 + $0x148] sm:$0xff]
    %v121 = vld [vmem:[#allocation2 + $0x150] sm:$0xff]
    %v122 = vld [vmem:[#allocation2 + $0x158] sm:$0xff]
    %v123 = vld [vmem:[#allocation2 + $0x160] sm:$0xff]
    %v124 = vld [vmem:[#allocation2 + $0x168] sm:$0xff]
    %v125 = vld [vmem:[#allocation2 + $0x170] sm:$0xff]
    %v126 = vld [vmem:[#allocation2 + $0x178] sm:$0xff]
    %v127 = vld [vmem:[#allocation2 + $0x180] sm:$0xff]
    %v128 = vld [vmem:[#allocation2 + $0x188] sm:$0xff]
    %v129 = vld [vmem:[#allocation2 + $0x190] sm:$0xff]
    %v130 = vld [vmem:[#allocation2 + $0x198] sm:$0xff]
    %v131 = vld [vmem:[#allocation2 + $0x1a0] sm:$0xff]
    %v132 = vld [vmem:[#allocation2 + $0x1a8] sm:$0xff]
    %v133 = vld [vmem:[#allocation2 + $0x1b0] sm:$0xff]
    %v134 = vld [vmem:[#allocation2 + $0x1b8] sm:$0xff]
    %v135 = vld [vmem:[#allocation2 + $0x1c0] sm:$0xff]
    %v136 = vld [vmem:[#allocation2 + $0x1c8] sm:$0xff]
    %v137 = vld [vmem:[#allocation2 + $0x1d0] sm:$0xff]
    %v138 = vld [vmem:[#allocation2 + $0x1d8] sm:$0xff]
    %v139 = vld [vmem:[#allocation2 + $0x1e0] sm:$0xff]
    %v140 = vld [vmem:[#allocation2 + $0x1e8] sm:$0xff]
    %v141 = vld [vmem:[#allocation2 + $0x1f0] sm:$0xff]
    %v142 = vld [vmem:[#allocation2 + $0x1f8] sm:$0xff]
    %v143 = vld [vmem:[#allocation2 + $0x200] sm:$0xff]
    %v144 = vld [vmem:[#allocation2 + $0x208] sm:$0xff]
    %v145 = vld [vmem:[#allocation2 + $0x210] sm:$0xff]
    %v146 = vld [vmem:[#allocation2 + $0x218] sm:$0xff]
    %v147 = vld [vmem:[#allocation2 + $0x220] sm:$0xff]
    %v148 = vld [vmem:[#allocation2 + $0x228] sm:$0xff]
    %v149 = vld [vmem:[#allocation2 + $0x230] sm:$0xff]
    %v150 = vld [vmem:[#allocation2 + $0x238] sm:$0xff]
    %v151 = vld [vmem:[#allocation2 + $0x240] sm:$0xff]
    %v152 = vld [vmem:[#allocation2 + $0x248] sm:$0xff]
    %v153 = vld [vmem:[#allocation2 + $0x250] sm:$0xff]
    %v154 = vld [vmem:[#allocation2 + $0x258] sm:$0xff]
    %v155 = vld [vmem:[#allocation2 + $0x260] sm:$0xff]
    %v156 = vld [vmem:[#allocation2 + $0x268] sm:$0xff]
    %v157 = vld [vmem:[#allocation2 + $0x270] sm:$0xff]
    %v158 = vld [vmem:[#allocation2 + $0x278] sm:$0xff]
    %v159 = vld [vmem:[#allocation2 + $0x280] sm:$0xff]
    %v160 = vld [vmem:[#allocation2 + $0x288] sm:$0xff]
    %v161 = vld [vmem:[#allocation2 + $0x290] sm:$0xff]
    %v162 = vld [vmem:[#allocation2 + $0x298] sm:$0xff]
    %v163 = vld [vmem:[#allocation2 + $0x2a0] sm:$0xff]
    %v164 = vld [vmem:[#allocation2 + $0x2a8] sm:$0xff]
    %v165 = vld [vmem:[#allocation2 + $0x2b0] sm:$0xff]
    %v166 = vld [vmem:[#allocation2 + $0x2b8] sm:$0xff]
    %v167 = vld [vmem:[#allocation2 + $0x2c0] sm:$0xff]
    %v168 = vld [vmem:[#allocation2 + $0x2c8] sm:$0xff]
    %v169 = vld [vmem:[#allocation2 + $0x2d0] sm:$0xff]
    %v170 = vld [vmem:[#allocation2 + $0x2d8] sm:$0xff]
    %v171 = vld [vmem:[#allocation2 + $0x2e0] sm:$0xff]
    %v172 = vld [vmem:[#allocation2 + $0x2e8] sm:$0xff]
    %v173 = vld [vmem:[#allocation2 + $0x2f0] sm:$0xff]
    %v174 = vld [vmem:[#allocation2 + $0x2f8] sm:$0xff]
    %v175 = vld [vmem:[#allocation2 + $0x300] sm:$0xff]
    %v176 = vld [vmem:[#allocation2 + $0x308] sm:$0xff]
    %v177 = vld [vmem:[#allocation2 + $0x310] sm:$0xff]
    %v178 = vld [vmem:[#allocation2 + $0x318] sm:$0xff]
    %v179 = vld [vmem:[#allocation2 + $0x320] sm:$0xff]
    %v180 = vld [vmem:[#allocation2 + $0x328] sm:$0xff]
    %v181 = vld [vmem:[#allocation2 + $0x330] sm:$0xff]
    %v182 = vld [vmem:[#allocation2 + $0x338] sm:$0xff]
    %v183 = vld [vmem:[#allocation2 + $0x340] sm:$0xff]
    %v184 = vld [vmem:[#allocation2 + $0x348] sm:$0xff]
    %v185 = vld [vmem:[#allocation2 + $0x350] sm:$0xff]
    %v186 = vld [vmem:[#allocation2 + $0x358] sm:$0xff]
    %v187 = vld [vmem:[#allocation2 + $0x360] sm:$0xff]
    %v188 = vld [vmem:[#allocation2 + $0x368] sm:$0xff]
    %v189 = vld [vmem:[#allocation2 + $0x370] sm:$0xff]
    %v190 = vld [vmem:[#allocation2 + $0x378] sm:$0xff]
    %v191 = vld [vmem:[#allocation2 + $0x380] sm:$0xff]
    %v192 = vld [vmem:[#allocation2 + $0x388] sm:$0xff]
    %v193 = vld [vmem:[#allocation2 + $0x390] sm:$0xff]
    %v194 = vld [vmem:[#allocation2 + $0x398] sm:$0xff]
    %v195 = vld [vmem:[#allocation2 + $0x3a0] sm:$0xff]
    %v196 = vld [vmem:[#allocation2 + $0x3a8] sm:$0xff]
    %v197 = vld [vmem:[#allocation2 + $0x3b0] sm:$0xff]
    %v198 = vld [vmem:[#allocation2 + $0x3b8] sm:$0xff]
    %v199 = vld [vmem:[#allocation2 + $0x3c0] sm:$0xff]
    %v200 = vld [vmem:[#allocation2 + $0x3c8] sm:$0xff]
    %v201 = vld [vmem:[#allocation2 + $0x3d0] sm:$0xff]
    %v202 = vld [vmem:[#allocation2 + $0x3d8] sm:$0xff]
    %v203 = vld [vmem:[#allocation2 + $0x3e0] sm:$0xff]
    %v204 = vld [vmem:[#allocation2 + $0x3e8] sm:$0xff]
    %v205 = vld [vmem:[#allocation2 + $0x3f0] sm:$0xff]
    %v206 = vld [vmem:[#allocation2 + $0x3f8] sm:$0xff]
    %v207 = vld [vmem:[#allocation2 + $0x400] sm:$0xff]
    %v208 = vld [vmem:[#allocation2 + $0x408] sm:$0xff]
    %v209 = vld [vmem:[#allocation2 + $0x410] sm:$0xff]
    %v210 = vld [vmem:[#allocation2 + $0x418] sm:$0xff]
    %v211 = vld [vmem:[#allocation2 + $0x420] sm:$0xff]
    %v212 = vld [vmem:[#allocation2 + $0x428] sm:$0xff]
    %v213 = vld [vmem:[#allocation2 + $0x430] sm:$0xff]
    %v214 = vld [vmem:[#allocation2 + $0x438] sm:$0xff]
    %v215 = vld [vmem:[#allocation2 + $0x440] sm:$0xff]
    %v216 = vld [vmem:[#allocation2 + $0x448] sm:$0xff]
    %v217 = vld [vmem:[#allocation2 + $0x450] sm:$0xff]
    %v218 = vld [vmem:[#allocation2 + $0x458] sm:$0xff]
    %v219 = vld [vmem:[#allocation2 + $0x460] sm:$0xff]
    %v220 = vld [vmem:[#allocation2 + $0x468] sm:$0xff]
    %v221 = vld [vmem:[#allocation2 + $0x470] sm:$0xff]
    %v222 = vld [vmem:[#allocation2 + $0x478] sm:$0xff]
    %v223 = vld [vmem:[#allocation2 + $0x480] sm:$0xff]
    %v224 = vld [vmem:[#allocation2 + $0x488] sm:$0xff]
    %v225 = vld [vmem:[#allocation2 + $0x490] sm:$0xff]
    %v226 = vld [vmem:[#allocation2 + $0x498] sm:$0xff]
    %v227 = vld [vmem:[#allocation2 + $0x4a0] sm:$0xff]
    %v228 = vld [vmem:[#allocation2 + $0x4a8] sm:$0xff]
    %v229 = vld [vmem:[#allocation2 + $0x4b0] sm:$0xff]
    %v230 = vld [vmem:[#allocation2 + $0x4b8] sm:$0xff]
    %v231 = vld [vmem:[#allocation2 + $0x4c0] sm:$0xff]
    %v232 = vld [vmem:[#allocation2 + $0x4c8] sm:$0xff]
    %v233 = vld [vmem:[#allocation2 + $0x4d0] sm:$0xff]
    %v234 = vld [vmem:[#allocation2 + $0x4d8] sm:$0xff]
    %v235 = vld [vmem:[#allocation2 + $0x4e0] sm:$0xff]
    %v236 = vld [vmem:[#allocation2 + $0x4e8] sm:$0xff]
    %v237 = vld [vmem:[#allocation2 + $0x4f0] sm:$0xff]
    %v238 = vld [vmem:[#allocation2 + $0x4f8] sm:$0xff]
    %v239 = vld [vmem:[#allocation2 + $0x500] sm:$0xff]
    %v240 = vld [vmem:[#allocation2 + $0x508] sm:$0xff]
    %v241 = vld [vmem:[#allocation2 + $0x510] sm:$0xff]
    %v242 = vld [vmem:[#allocation2 + $0x518] sm:$0xff]
    %v243 = vld [vmem:[#allocation2 + $0x520] sm:$0xff]
    %v244 = vld [vmem:[#allocation2 + $0x528] sm:$0xff]
    %v245 = vld [vmem:[#allocation2 + $0x530] sm:$0xff]
    %v246 = vld [vmem:[#allocation2 + $0x538] sm:$0xff]
    %v247 = vld [vmem:[#allocation2 + $0x540] sm:$0xff]
    %v248 = vld [vmem:[#allocation2 + $0x548] sm:$0xff]
    %v249 = vld [vmem:[#allocation2 + $0x550] sm:$0xff]
    %v250 = vld [vmem:[#allocation2 + $0x558] sm:$0xff]
    %v251 = vld [vmem:[#allocation2 + $0x560] sm:$0xff]
    %v252 = vld [vmem:[#allocation2 + $0x568] sm:$0xff]
    %v253 = vld [vmem:[#allocation2 + $0x570] sm:$0xff]
    %v254 = vld [vmem:[#allocation2 + $0x578] sm:$0xff]
    %v255 = vld [vmem:[#allocation2 + $0x580] sm:$0xff]
    %v256 = vld [vmem:[#allocation2 + $0x588] sm:$0xff]
    %v257 = vld [vmem:[#allocation2 + $0x590] sm:$0xff]
    %v258 = vld [vmem:[#allocation2 + $0x598] sm:$0xff]
    %v259 = vld [vmem:[#allocation2 + $0x5a0] sm:$0xff]
    %v260 = vld [vmem:[#allocation2 + $0x5a8] sm:$0xff]
    %v261 = vld [vmem:[#allocation2 + $0x5b0] sm:$0xff]
    %v262 = vld [vmem:[#allocation2 + $0x5b8] sm:$0xff]
    %v263 = vld [vmem:[#allocation2 + $0x5c0] sm:$0xff]
    %v264 = vld [vmem:[#allocation2 + $0x5c8] sm:$0xff]
    %v265 = vld [vmem:[#allocation2 + $0x5d0] sm:$0xff]
    %v266 = vld [vmem:[#allocation2 + $0x5d8] sm:$0xff]
    %v267 = vld [vmem:[#allocation2 + $0x5e0] sm:$0xff]
    %v268 = vld [vmem:[#allocation2 + $0x5e8] sm:$0xff]
    %v269 = vld [vmem:[#allocation2 + $0x5f0] sm:$0xff]
    %v270 = vld [vmem:[#allocation2 + $0x5f8] sm:$0xff]
    %v271 = vld [vmem:[#allocation2 + $0x600] sm:$0xff]
    %v272 = vld [vmem:[#allocation2 + $0x608] sm:$0xff]
    %v273 = vld [vmem:[#allocation2 + $0x610] sm:$0xff]
    %v274 = vld [vmem:[#allocation2 + $0x618] sm:$0xff]
    %v275 = vld [vmem:[#allocation2 + $0x620] sm:$0xff]
    %v276 = vld [vmem:[#allocation2 + $0x628] sm:$0xff]
    %v277 = vld [vmem:[#allocation2 + $0x630] sm:$0xff]
    %v278 = vld [vmem:[#allocation2 + $0x638] sm:$0xff]
    %v279 = vld [vmem:[#allocation2 + $0x640] sm:$0xff]
    %v280 = vld [vmem:[#allocation2 + $0x648] sm:$0xff]
    %v281 = vld [vmem:[#allocation2 + $0x650] sm:$0xff]
    %v282 = vld [vmem:[#allocation2 + $0x658] sm:$0xff]
    %v283 = vld [vmem:[#allocation2 + $0x660] sm:$0xff]
    %v284 = vld [vmem:[#allocation2 + $0x668] sm:$0xff]
    %v285 = vld [vmem:[#allocation2 + $0x670] sm:$0xff]
    %v286 = vld [vmem:[#allocation2 + $0x678] sm:$0xff]
    %v287 = vld [vmem:[#allocation2 + $0x680] sm:$0xff]
    %v288 = vld [vmem:[#allocation2 + $0x688] sm:$0xff]
    %v289 = vld [vmem:[#allocation2 + $0x690] sm:$0xff]
    %v290 = vld [vmem:[#allocation2 + $0x698] sm:$0xff]
    %v291 = vld [vmem:[#allocation2 + $0x6a0] sm:$0xff]
    %v292 = vld [vmem:[#allocation2 + $0x6a8] sm:$0xff]
    %v293 = vld [vmem:[#allocation2 + $0x6b0] sm:$0xff]
    %v294 = vld [vmem:[#allocation2 + $0x6b8] sm:$0xff]
    %v295 = vld [vmem:[#allocation2 + $0x6c0] sm:$0xff]
    %v296 = vld [vmem:[#allocation2 + $0x6c8] sm:$0xff]
    %v297 = vld [vmem:[#allocation2 + $0x6d0] sm:$0xff]
    %v298 = vld [vmem:[#allocation2 + $0x6d8] sm:$0xff]
    %v299 = vld [vmem:[#allocation2 + $0x6e0] sm:$0xff]
    %v300 = vld [vmem:[#allocation2 + $0x6e8] sm:$0xff]
    %v301 = vld [vmem:[#allocation2 + $0x6f0] sm:$0xff]
    %v302 = vld [vmem:[#allocation2 + $0x6f8] sm:$0xff]
    %v303 = vld [vmem:[#allocation2 + $0x700] sm:$0xff]
    %v304 = vld [vmem:[#allocation2 + $0x708] sm:$0xff]
    %v305 = vld [vmem:[#allocation2 + $0x710] sm:$0xff]
    %v306 = vld [vmem:[#allocation2 + $0x718] sm:$0xff]
    %v307 = vld [vmem:[#allocation2 + $0x720] sm:$0xff]
    %v308 = vld [vmem:[#allocation2 + $0x728] sm:$0xff]
    %v309 = vld [vmem:[#allocation2 + $0x730] sm:$0xff]
    %v310 = vld [vmem:[#allocation2 + $0x738] sm:$0xff]
    %v311 = vld [vmem:[#allocation2 + $0x740] sm:$0xff]
    %v312 = vld [vmem:[#allocation2 + $0x748] sm:$0xff]
    %v313 = vld [vmem:[#allocation2 + $0x750] sm:$0xff]
    %v314 = vld [vmem:[#allocation2 + $0x758] sm:$0xff]
    %v315 = vld [vmem:[#allocation2 + $0x760] sm:$0xff]
    %v316 = vld [vmem:[#allocation2 + $0x768] sm:$0xff]
    %v317 = vld [vmem:[#allocation2 + $0x770] sm:$0xff]
    %v318 = vld [vmem:[#allocation2 + $0x778] sm:$0xff]
    %v319 = vld [vmem:[#allocation2 + $0x780] sm:$0xff]
    %v320 = vld [vmem:[#allocation2 + $0x788] sm:$0xff]
    %v321 = vld [vmem:[#allocation2 + $0x790] sm:$0xff]
    %v322 = vld [vmem:[#allocation2 + $0x798] sm:$0xff]
    %v323 = vld [vmem:[#allocation2 + $0x7a0] sm:$0xff]
    %v324 = vld [vmem:[#allocation2 + $0x7a8] sm:$0xff]
    %v325 = vld [vmem:[#allocation2 + $0x7b0] sm:$0xff]
    %v326 = vld [vmem:[#allocation2 + $0x7b8] sm:$0xff]
    %v327 = vld [vmem:[#allocation2 + $0x7c0] sm:$0xff]
    %v328 = vld [vmem:[#allocation2 + $0x7c8] sm:$0xff]
    %v329 = vld [vmem:[%s2] sm:$0xf]
    %v331 = vlaneseq
    %v332 = vshrl.u32 %v331, 7
    %v333 = vsub.s32 0, %v332
    %v334 = vrot.slane %v329, %v333
    %v335 = vlaneseq
    %v336 = vshrl.u32 %v335, 7
    %v337 = vsub.s32 1, %v336
    %v338 = vrot.slane %v329, %v337
    %v339 = vlaneseq
    %v340 = vshrl.u32 %v339, 7
    %v341 = vsub.s32 2, %v340
    %v342 = vrot.slane %v329, %v341
    %v343 = vlaneseq
    %v344 = vshrl.u32 %v343, 7
    %v345 = vsub.s32 3, %v344
    %v346 = vrot.slane %v329, %v345
    %v601 = vunpack.c.l.b16 %v79
    %v602 = vunpack.c.h.b16 %v79
    %v603 = vunpack.c.l.b16 %v80
    %v604 = vunpack.c.h.b16 %v80
    %v605 = vunpack.c.l.b16 %v81
    %v606 = vunpack.c.h.b16 %v81
    %v607 = vunpack.c.l.b16 %v82
    %v608 = vunpack.c.h.b16 %v82
    %v609 = vunpack.c.l.b16 %v83
    %v610 = vunpack.c.h.b16 %v83
    %v611 = vunpack.c.l.b16 %v84
    %v612 = vunpack.c.h.b16 %v84
    %v613 = vunpack.c.l.b16 %v85
    %v614 = vunpack.c.h.b16 %v85
    %v615 = vunpack.c.l.b16 %v86
    %v616 = vunpack.c.h.b16 %v86
    %v617 = vunpack.c.l.b16 %v87
    %v618 = vunpack.c.h.b16 %v87
    %v619 = vunpack.c.l.b16 %v88
    %v620 = vunpack.c.h.b16 %v88
    %v621 = vunpack.c.l.b16 %v89
    %v622 = vunpack.c.h.b16 %v89
    %v623 = vunpack.c.l.b16 %v90
    %v624 = vunpack.c.h.b16 %v90
    %v625 = vunpack.c.l.b16 %v91
    %v626 = vunpack.c.h.b16 %v91
    %v627 = vunpack.c.l.b16 %v92
    %v628 = vunpack.c.h.b16 %v92
    %v629 = vunpack.c.l.b16 %v93
    %v630 = vunpack.c.h.b16 %v93
    %v631 = vunpack.c.l.b16 %v94
    %v632 = vunpack.c.h.b16 %v94
    %v633 = vunpack.c.l.b16 %v95
    %v634 = vunpack.c.h.b16 %v95
    %v635 = vunpack.c.l.b16 %v96
    %v636 = vunpack.c.h.b16 %v96
    %v637 = vunpack.c.l.b16 %v97
    %v638 = vunpack.c.h.b16 %v97
    %v639 = vunpack.c.l.b16 %v98
    %v640 = vunpack.c.h.b16 %v98
    %v641 = vunpack.c.l.b16 %v99
    %v642 = vunpack.c.h.b16 %v99
    %v643 = vunpack.c.l.b16 %v100
    %v644 = vunpack.c.h.b16 %v100
    %v645 = vunpack.c.l.b16 %v101
    %v646 = vunpack.c.h.b16 %v101
    %v647 = vunpack.c.l.b16 %v102
    %v648 = vunpack.c.h.b16 %v102
    %v649 = vunpack.c.l.b16 %v103
    %v650 = vunpack.c.h.b16 %v103
    %v651 = vunpack.c.l.b16 %v104
    %v652 = vunpack.c.h.b16 %v104
    %v653 = vunpack.c.l.b16 %v105
    %v654 = vunpack.c.h.b16 %v105
    %v655 = vunpack.c.l.b16 %v106
    %v656 = vunpack.c.h.b16 %v106
    %v657 = vunpack.c.l.b16 %v107
    %v658 = vunpack.c.h.b16 %v107
    %v659 = vunpack.c.l.b16 %v108
    %v660 = vunpack.c.h.b16 %v108
    %v661 = vunpack.c.l.b16 %v109
    %v662 = vunpack.c.h.b16 %v109
    %v663 = vunpack.c.l.b16 %v110
    %v664 = vunpack.c.h.b16 %v110
    %v665 = vunpack.c.l.b16 %v111
    %v666 = vunpack.c.h.b16 %v111
    %v667 = vunpack.c.l.b16 %v112
    %v668 = vunpack.c.h.b16 %v112
    %v669 = vunpack.c.l.b16 %v113
    %v670 = vunpack.c.h.b16 %v113
    %v671 = vunpack.c.l.b16 %v114
    %v672 = vunpack.c.h.b16 %v114
    %v673 = vunpack.c.l.b16 %v115
    %v674 = vunpack.c.h.b16 %v115
    %v675 = vunpack.c.l.b16 %v116
    %v676 = vunpack.c.h.b16 %v116
    %v677 = vunpack.c.l.b16 %v117
    %v678 = vunpack.c.h.b16 %v117
    %v679 = vunpack.c.l.b16 %v118
    %v680 = vunpack.c.h.b16 %v118
    %v681 = vunpack.c.l.b16 %v119
    %v682 = vunpack.c.h.b16 %v119
    %v683 = vunpack.c.l.b16 %v120
    %v684 = vunpack.c.h.b16 %v120
    %v685 = vunpack.c.l.b16 %v121
    %v686 = vunpack.c.h.b16 %v121
    %v687 = vunpack.c.l.b16 %v122
    %v688 = vunpack.c.h.b16 %v122
    %v689 = vunpack.c.l.b16 %v123
    %v690 = vunpack.c.h.b16 %v123
    %v691 = vunpack.c.l.b16 %v124
    %v692 = vunpack.c.h.b16 %v124
    %v693 = vunpack.c.l.b16 %v125
    %v694 = vunpack.c.h.b16 %v125
    %v695 = vunpack.c.l.b16 %v126
    %v696 = vunpack.c.h.b16 %v126
    %v697 = vunpack.c.l.b16 %v127
    %v698 = vunpack.c.h.b16 %v127
    %v699 = vunpack.c.l.b16 %v128
    %v700 = vunpack.c.h.b16 %v128
    %v701 = vunpack.c.l.b16 %v129
    %v702 = vunpack.c.h.b16 %v129
    %v703 = vunpack.c.l.b16 %v130
    %v704 = vunpack.c.h.b16 %v130
    %v705 = vunpack.c.l.b16 %v131
    %v706 = vunpack.c.h.b16 %v131
    %v707 = vunpack.c.l.b16 %v132
    %v708 = vunpack.c.h.b16 %v132
    %v709 = vunpack.c.l.b16 %v133
    %v710 = vunpack.c.h.b16 %v133
    %v711 = vunpack.c.l.b16 %v134
    %v712 = vunpack.c.h.b16 %v134
    %v713 = vunpack.c.l.b16 %v135
    %v714 = vunpack.c.h.b16 %v135
    %v715 = vunpack.c.l.b16 %v136
    %v716 = vunpack.c.h.b16 %v136
    %v717 = vunpack.c.l.b16 %v137
    %v718 = vunpack.c.h.b16 %v137
    %v719 = vunpack.c.l.b16 %v138
    %v720 = vunpack.c.h.b16 %v138
    %v721 = vunpack.c.l.b16 %v139
    %v722 = vunpack.c.h.b16 %v139
    %v723 = vunpack.c.l.b16 %v140
    %v724 = vunpack.c.h.b16 %v140
    %v725 = vunpack.c.l.b16 %v141
    %v726 = vunpack.c.h.b16 %v141
    %v727 = vunpack.c.l.b16 %v142
    %v728 = vunpack.c.h.b16 %v142
    %v729 = vunpack.c.l.b16 %v143
    %v730 = vunpack.c.h.b16 %v143
    %v731 = vunpack.c.l.b16 %v144
    %v732 = vunpack.c.h.b16 %v144
    %v733 = vunpack.c.l.b16 %v145
    %v734 = vunpack.c.h.b16 %v145
    %v735 = vunpack.c.l.b16 %v146
    %v736 = vunpack.c.h.b16 %v146
    %v737 = vunpack.c.l.b16 %v147
    %v738 = vunpack.c.h.b16 %v147
    %v739 = vunpack.c.l.b16 %v148
    %v740 = vunpack.c.h.b16 %v148
    %v741 = vunpack.c.l.b16 %v149
    %v742 = vunpack.c.h.b16 %v149
    %v743 = vunpack.c.l.b16 %v150
    %v744 = vunpack.c.h.b16 %v150
    %v745 = vunpack.c.l.b16 %v151
    %v746 = vunpack.c.h.b16 %v151
    %v747 = vunpack.c.l.b16 %v152
    %v748 = vunpack.c.h.b16 %v152
    %v749 = vunpack.c.l.b16 %v153
    %v750 = vunpack.c.h.b16 %v153
    %v751 = vunpack.c.l.b16 %v154
    %v752 = vunpack.c.h.b16 %v154
    %v753 = vunpack.c.l.b16 %v155
    %v754 = vunpack.c.h.b16 %v155
    %v755 = vunpack.c.l.b16 %v156
    %v756 = vunpack.c.h.b16 %v156
    %v757 = vunpack.c.l.b16 %v157
    %v758 = vunpack.c.h.b16 %v157
    %v759 = vunpack.c.l.b16 %v158
    %v760 = vunpack.c.h.b16 %v158
    %v761 = vunpack.c.l.b16 %v159
    %v762 = vunpack.c.h.b16 %v159
    %v763 = vunpack.c.l.b16 %v160
    %v764 = vunpack.c.h.b16 %v160
    %v765 = vunpack.c.l.b16 %v161
    %v766 = vunpack.c.h.b16 %v161
    %v767 = vunpack.c.l.b16 %v162
    %v768 = vunpack.c.h.b16 %v162
    %v769 = vunpack.c.l.b16 %v163
    %v770 = vunpack.c.h.b16 %v163
    %v771 = vunpack.c.l.b16 %v164
    %v772 = vunpack.c.h.b16 %v164
    %v773 = vunpack.c.l.b16 %v165
    %v774 = vunpack.c.h.b16 %v165
    %v775 = vunpack.c.l.b16 %v166
    %v776 = vunpack.c.h.b16 %v166
    %v777 = vunpack.c.l.b16 %v167
    %v778 = vunpack.c.h.b16 %v167
    %v779 = vunpack.c.l.b16 %v168
    %v780 = vunpack.c.h.b16 %v168
    %v781 = vunpack.c.l.b16 %v169
    %v782 = vunpack.c.h.b16 %v169
    %v783 = vunpack.c.l.b16 %v170
    %v784 = vunpack.c.h.b16 %v170
    %v785 = vunpack.c.l.b16 %v171
    %v786 = vunpack.c.h.b16 %v171
    %v787 = vunpack.c.l.b16 %v172
    %v788 = vunpack.c.h.b16 %v172
    %v789 = vunpack.c.l.b16 %v173
    %v790 = vunpack.c.h.b16 %v173
    %v791 = vunpack.c.l.b16 %v174
    %v792 = vunpack.c.h.b16 %v174
    %v793 = vunpack.c.l.b16 %v175
    %v794 = vunpack.c.h.b16 %v175
    %v795 = vunpack.c.l.b16 %v176
    %v796 = vunpack.c.h.b16 %v176
    %v797 = vunpack.c.l.b16 %v177
    %v798 = vunpack.c.h.b16 %v177
    %v799 = vunpack.c.l.b16 %v178
    %v800 = vunpack.c.h.b16 %v178
    %v801 = vunpack.c.l.b16 %v179
    %v802 = vunpack.c.h.b16 %v179
    %v803 = vunpack.c.l.b16 %v180
    %v804 = vunpack.c.h.b16 %v180
    %v805 = vunpack.c.l.b16 %v181
    %v806 = vunpack.c.h.b16 %v181
    %v807 = vunpack.c.l.b16 %v182
    %v808 = vunpack.c.h.b16 %v182
    %v809 = vunpack.c.l.b16 %v183
    %v810 = vunpack.c.h.b16 %v183
    %v811 = vunpack.c.l.b16 %v184
    %v812 = vunpack.c.h.b16 %v184
    %v813 = vunpack.c.l.b16 %v185
    %v814 = vunpack.c.h.b16 %v185
    %v815 = vunpack.c.l.b16 %v186
    %v816 = vunpack.c.h.b16 %v186
    %v817 = vunpack.c.l.b16 %v187
    %v818 = vunpack.c.h.b16 %v187
    %v819 = vunpack.c.l.b16 %v188
    %v820 = vunpack.c.h.b16 %v188
    %v821 = vunpack.c.l.b16 %v189
    %v822 = vunpack.c.h.b16 %v189
    %v823 = vunpack.c.l.b16 %v190
    %v824 = vunpack.c.h.b16 %v190
    %v825 = vunpack.c.l.b16 %v191
    %v826 = vunpack.c.h.b16 %v191
    %v827 = vunpack.c.l.b16 %v192
    %v828 = vunpack.c.h.b16 %v192
    %v829 = vunpack.c.l.b16 %v193
    %v830 = vunpack.c.h.b16 %v193
    %v831 = vunpack.c.l.b16 %v194
    %v832 = vunpack.c.h.b16 %v194
    %v833 = vunpack.c.l.b16 %v195
    %v834 = vunpack.c.h.b16 %v195
    %v835 = vunpack.c.l.b16 %v196
    %v836 = vunpack.c.h.b16 %v196
    %v837 = vunpack.c.l.b16 %v197
    %v838 = vunpack.c.h.b16 %v197
    %v839 = vunpack.c.l.b16 %v198
    %v840 = vunpack.c.h.b16 %v198
    %v841 = vunpack.c.l.b16 %v199
    %v842 = vunpack.c.h.b16 %v199
    %v843 = vunpack.c.l.b16 %v200
    %v844 = vunpack.c.h.b16 %v200
    %v845 = vunpack.c.l.b16 %v201
    %v846 = vunpack.c.h.b16 %v201
    %v847 = vunpack.c.l.b16 %v202
    %v848 = vunpack.c.h.b16 %v202
    %v849 = vunpack.c.l.b16 %v203
    %v850 = vunpack.c.h.b16 %v203
    %v851 = vunpack.c.l.b16 %v204
    %v852 = vunpack.c.h.b16 %v204
    %v853 = vunpack.c.l.b16 %v205
    %v854 = vunpack.c.h.b16 %v205
    %v855 = vunpack.c.l.b16 %v206
    %v856 = vunpack.c.h.b16 %v206
    %v857 = vunpack.c.l.b16 %v207
    %v858 = vunpack.c.h.b16 %v207
    %v859 = vunpack.c.l.b16 %v208
    %v860 = vunpack.c.h.b16 %v208
    %v861 = vunpack.c.l.b16 %v209
    %v862 = vunpack.c.h.b16 %v209
    %v863 = vunpack.c.l.b16 %v210
    %v864 = vunpack.c.h.b16 %v210
    %v865 = vunpack.c.l.b16 %v211
    %v866 = vunpack.c.h.b16 %v211
    %v867 = vunpack.c.l.b16 %v212
    %v868 = vunpack.c.h.b16 %v212
    %v869 = vunpack.c.l.b16 %v213
    %v870 = vunpack.c.h.b16 %v213
    %v871 = vunpack.c.l.b16 %v214
    %v872 = vunpack.c.h.b16 %v214
    %v873 = vunpack.c.l.b16 %v215
    %v874 = vunpack.c.h.b16 %v215
    %v875 = vunpack.c.l.b16 %v216
    %v876 = vunpack.c.h.b16 %v216
    %v877 = vunpack.c.l.b16 %v217
    %v878 = vunpack.c.h.b16 %v217
    %v879 = vunpack.c.l.b16 %v218
    %v880 = vunpack.c.h.b16 %v218
    %v881 = vunpack.c.l.b16 %v219
    %v882 = vunpack.c.h.b16 %v219
    %v883 = vunpack.c.l.b16 %v220
    %v884 = vunpack.c.h.b16 %v220
    %v885 = vunpack.c.l.b16 %v221
    %v886 = vunpack.c.h.b16 %v221
    %v887 = vunpack.c.l.b16 %v222
    %v888 = vunpack.c.h.b16 %v222
    %v889 = vunpack.c.l.b16 %v223
    %v890 = vunpack.c.h.b16 %v223
    %v891 = vunpack.c.l.b16 %v224
    %v892 = vunpack.c.h.b16 %v224
    %v893 = vunpack.c.l.b16 %v225
    %v894 = vunpack.c.h.b16 %v225
    %v895 = vunpack.c.l.b16 %v226
    %v896 = vunpack.c.h.b16 %v226
    %v897 = vunpack.c.l.b16 %v227
    %v898 = vunpack.c.h.b16 %v227
    %v899 = vunpack.c.l.b16 %v228
    %v900 = vunpack.c.h.b16 %v228
    %v901 = vunpack.c.l.b16 %v229
    %v902 = vunpack.c.h.b16 %v229
    %v903 = vunpack.c.l.b16 %v230
    %v904 = vunpack.c.h.b16 %v230
    %v905 = vunpack.c.l.b16 %v231
    %v906 = vunpack.c.h.b16 %v231
    %v907 = vunpack.c.l.b16 %v232
    %v908 = vunpack.c.h.b16 %v232
    %v909 = vunpack.c.l.b16 %v233
    %v910 = vunpack.c.h.b16 %v233
    %v911 = vunpack.c.l.b16 %v234
    %v912 = vunpack.c.h.b16 %v234
    %v913 = vunpack.c.l.b16 %v235
    %v914 = vunpack.c.h.b16 %v235
    %v915 = vunpack.c.l.b16 %v236
    %v916 = vunpack.c.h.b16 %v236
    %v917 = vunpack.c.l.b16 %v237
    %v918 = vunpack.c.h.b16 %v237
    %v919 = vunpack.c.l.b16 %v238
    %v920 = vunpack.c.h.b16 %v238
    %v921 = vunpack.c.l.b16 %v239
    %v922 = vunpack.c.h.b16 %v239
    %v923 = vunpack.c.l.b16 %v240
    %v924 = vunpack.c.h.b16 %v240
    %v925 = vunpack.c.l.b16 %v241
    %v926 = vunpack.c.h.b16 %v241
    %v927 = vunpack.c.l.b16 %v242
    %v928 = vunpack.c.h.b16 %v242
    %v929 = vunpack.c.l.b16 %v243
    %v930 = vunpack.c.h.b16 %v243
    %v931 = vunpack.c.l.b16 %v244
    %v932 = vunpack.c.h.b16 %v244
    %v933 = vunpack.c.l.b16 %v245
    %v934 = vunpack.c.h.b16 %v245
    %v935 = vunpack.c.l.b16 %v246
    %v936 = vunpack.c.h.b16 %v246
    %v937 = vunpack.c.l.b16 %v247
    %v938 = vunpack.c.h.b16 %v247
    %v939 = vunpack.c.l.b16 %v248
    %v940 = vunpack.c.h.b16 %v248
    %v941 = vunpack.c.l.b16 %v249
    %v942 = vunpack.c.h.b16 %v249
    %v943 = vunpack.c.l.b16 %v250
    %v944 = vunpack.c.h.b16 %v250
    %v945 = vunpack.c.l.b16 %v251
    %v946 = vunpack.c.h.b16 %v251
    %v947 = vunpack.c.l.b16 %v252
    %v948 = vunpack.c.h.b16 %v252
    %v949 = vunpack.c.l.b16 %v253
    %v950 = vunpack.c.h.b16 %v253
    %v951 = vunpack.c.l.b16 %v254
    %v952 = vunpack.c.h.b16 %v254
    %v953 = vunpack.c.l.b16 %v255
    %v954 = vunpack.c.h.b16 %v255
    %v955 = vunpack.c.l.b16 %v256
    %v956 = vunpack.c.h.b16 %v256
    %v957 = vunpack.c.l.b16 %v257
    %v958 = vunpack.c.h.b16 %v257
    %v959 = vunpack.c.l.b16 %v258
    %v960 = vunpack.c.h.b16 %v258
    %v961 = vunpack.c.l.b16 %v259
    %v962 = vunpack.c.h.b16 %v259
    %v963 = vunpack.c.l.b16 %v260
    %v964 = vunpack.c.h.b16 %v260
    %v965 = vunpack.c.l.b16 %v261
    %v966 = vunpack.c.h.b16 %v261
    %v967 = vunpack.c.l.b16 %v262
    %v968 = vunpack.c.h.b16 %v262
    %v969 = vunpack.c.l.b16 %v263
    %v970 = vunpack.c.h.b16 %v263
    %v971 = vunpack.c.l.b16 %v264
    %v972 = vunpack.c.h.b16 %v264
    %v973 = vunpack.c.l.b16 %v265
    %v974 = vunpack.c.h.b16 %v265
    %v975 = vunpack.c.l.b16 %v266
    %v976 = vunpack.c.h.b16 %v266
    %v977 = vunpack.c.l.b16 %v267
    %v978 = vunpack.c.h.b16 %v267
    %v979 = vunpack.c.l.b16 %v268
    %v980 = vunpack.c.h.b16 %v268
    %v981 = vunpack.c.l.b16 %v269
    %v982 = vunpack.c.h.b16 %v269
    %v983 = vunpack.c.l.b16 %v270
    %v984 = vunpack.c.h.b16 %v270
    %v985 = vunpack.c.l.b16 %v271
    %v986 = vunpack.c.h.b16 %v271
    %v987 = vunpack.c.l.b16 %v272
    %v988 = vunpack.c.h.b16 %v272
    %v989 = vunpack.c.l.b16 %v273
    %v990 = vunpack.c.h.b16 %v273
    %v991 = vunpack.c.l.b16 %v274
    %v992 = vunpack.c.h.b16 %v274
    %v993 = vunpack.c.l.b16 %v275
    %v994 = vunpack.c.h.b16 %v275
    %v995 = vunpack.c.l.b16 %v276
    %v996 = vunpack.c.h.b16 %v276
    %v997 = vunpack.c.l.b16 %v277
    %v998 = vunpack.c.h.b16 %v277
    %v999 = vunpack.c.l.b16 %v278
    %v1000 = vunpack.c.h.b16 %v278
    %v1001 = vunpack.c.l.b16 %v279
    %v1002 = vunpack.c.h.b16 %v279
    %v1003 = vunpack.c.l.b16 %v280
    %v1004 = vunpack.c.h.b16 %v280
    %v1005 = vunpack.c.l.b16 %v281
    %v1006 = vunpack.c.h.b16 %v281
    %v1007 = vunpack.c.l.b16 %v282
    %v1008 = vunpack.c.h.b16 %v282
    %v1009 = vunpack.c.l.b16 %v283
    %v1010 = vunpack.c.h.b16 %v283
    %v1011 = vunpack.c.l.b16 %v284
    %v1012 = vunpack.c.h.b16 %v284
    %v1013 = vunpack.c.l.b16 %v285
    %v1014 = vunpack.c.h.b16 %v285
    %v1015 = vunpack.c.l.b16 %v286
    %v1016 = vunpack.c.h.b16 %v286
    %v1017 = vunpack.c.l.b16 %v287
    %v1018 = vunpack.c.h.b16 %v287
    %v1019 = vunpack.c.l.b16 %v288
    %v1020 = vunpack.c.h.b16 %v288
    %v1021 = vunpack.c.l.b16 %v289
    %v1022 = vunpack.c.h.b16 %v289
    %v1023 = vunpack.c.l.b16 %v290
    %v1024 = vunpack.c.h.b16 %v290
    %v1025 = vunpack.c.l.b16 %v291
    %v1026 = vunpack.c.h.b16 %v291
    %v1027 = vunpack.c.l.b16 %v292
    %v1028 = vunpack.c.h.b16 %v292
    %v1029 = vunpack.c.l.b16 %v293
    %v1030 = vunpack.c.h.b16 %v293
    %v1031 = vunpack.c.l.b16 %v294
    %v1032 = vunpack.c.h.b16 %v294
    %v1033 = vunpack.c.l.b16 %v295
    %v1034 = vunpack.c.h.b16 %v295
    %v1035 = vunpack.c.l.b16 %v296
    %v1036 = vunpack.c.h.b16 %v296
    %v1037 = vunpack.c.l.b16 %v297
    %v1038 = vunpack.c.h.b16 %v297
    %v1039 = vunpack.c.l.b16 %v298
    %v1040 = vunpack.c.h.b16 %v298
    %v1041 = vunpack.c.l.b16 %v299
    %v1042 = vunpack.c.h.b16 %v299
    %v1043 = vunpack.c.l.b16 %v300
    %v1044 = vunpack.c.h.b16 %v300
    %v1045 = vunpack.c.l.b16 %v301
    %v1046 = vunpack.c.h.b16 %v301
    %v1047 = vunpack.c.l.b16 %v302
    %v1048 = vunpack.c.h.b16 %v302
    %v1049 = vunpack.c.l.b16 %v303
    %v1050 = vunpack.c.h.b16 %v303
    %v1051 = vunpack.c.l.b16 %v304
    %v1052 = vunpack.c.h.b16 %v304
    %v1053 = vunpack.c.l.b16 %v305
    %v1054 = vunpack.c.h.b16 %v305
    %v1055 = vunpack.c.l.b16 %v306
    %v1056 = vunpack.c.h.b16 %v306
    %v1057 = vunpack.c.l.b16 %v307
    %v1058 = vunpack.c.h.b16 %v307
    %v1059 = vunpack.c.l.b16 %v308
    %v1060 = vunpack.c.h.b16 %v308
    %v1061 = vunpack.c.l.b16 %v309
    %v1062 = vunpack.c.h.b16 %v309
    %v1063 = vunpack.c.l.b16 %v310
    %v1064 = vunpack.c.h.b16 %v310
    %v1065 = vunpack.c.l.b16 %v311
    %v1066 = vunpack.c.h.b16 %v311
    %v1067 = vunpack.c.l.b16 %v312
    %v1068 = vunpack.c.h.b16 %v312
    %v1069 = vunpack.c.l.b16 %v313
    %v1070 = vunpack.c.h.b16 %v313
    %v1071 = vunpack.c.l.b16 %v314
    %v1072 = vunpack.c.h.b16 %v314
    %v1073 = vunpack.c.l.b16 %v315
    %v1074 = vunpack.c.h.b16 %v315
    %v1075 = vunpack.c.l.b16 %v316
    %v1076 = vunpack.c.h.b16 %v316
    %v1077 = vunpack.c.l.b16 %v317
    %v1078 = vunpack.c.h.b16 %v317
    %v1079 = vunpack.c.l.b16 %v318
    %v1080 = vunpack.c.h.b16 %v318
    %v1081 = vunpack.c.l.b16 %v319
    %v1082 = vunpack.c.h.b16 %v319
    %v1083 = vunpack.c.l.b16 %v320
    %v1084 = vunpack.c.h.b16 %v320
    %v1085 = vunpack.c.l.b16 %v321
    %v1086 = vunpack.c.h.b16 %v321
    %v1087 = vunpack.c.l.b16 %v322
    %v1088 = vunpack.c.h.b16 %v322
    %v1089 = vunpack.c.l.b16 %v323
    %v1090 = vunpack.c.h.b16 %v323
    %v1091 = vunpack.c.l.b16 %v324
    %v1092 = vunpack.c.h.b16 %v324
    %v1093 = vunpack.c.l.b16 %v325
    %v1094 = vunpack.c.h.b16 %v325
    %v1095 = vunpack.c.l.b16 %v326
    %v1096 = vunpack.c.h.b16 %v326
    %v1097 = vunpack.c.l.b16 %v327
    %v1098 = vunpack.c.h.b16 %v327
    %v1099 = vunpack.c.l.b16 %v328
    %v1100 = vunpack.c.h.b16 %v328
    %v1101 = vpack.c.b16 %v605, %v601
    %v1102 = vpack.c.b16 %v606, %v602
    %v1103 = vpack.c.b16 %v607, %v603
    %v1104 = vpack.c.b16 %v608, %v604
    %v1105 = vpack.c.b16 %v613, %v609
    %v1106 = vpack.c.b16 %v614, %v610
    %v1107 = vpack.c.b16 %v615, %v611
    %v1108 = vpack.c.b16 %v616, %v612
    %v1109 = vpack.c.b16 %v621, %v617
    %v1110 = vpack.c.b16 %v622, %v618
    %v1111 = vpack.c.b16 %v623, %v619
    %v1112 = vpack.c.b16 %v624, %v620
    %v1113 = vpack.c.b16 %v629, %v625
    %v1114 = vpack.c.b16 %v630, %v626
    %v1115 = vpack.c.b16 %v631, %v627
    %v1116 = vpack.c.b16 %v632, %v628
    %v1117 = vpack.c.b16 %v637, %v633
    %v1118 = vpack.c.b16 %v638, %v634
    %v1119 = vpack.c.b16 %v639, %v635
    %v1120 = vpack.c.b16 %v640, %v636
    %v1121 = vpack.c.b16 %v645, %v641
    %v1122 = vpack.c.b16 %v646, %v642
    %v1123 = vpack.c.b16 %v647, %v643
    %v1124 = vpack.c.b16 %v648, %v644
    %v1125 = vpack.c.b16 %v653, %v649
    %v1126 = vpack.c.b16 %v654, %v650
    %v1127 = vpack.c.b16 %v655, %v651
    %v1128 = vpack.c.b16 %v656, %v652
    %v1129 = vpack.c.b16 %v661, %v657
    %v1130 = vpack.c.b16 %v662, %v658
    %v1131 = vpack.c.b16 %v663, %v659
    %v1132 = vpack.c.b16 %v664, %v660
    %v1133 = vpack.c.b16 %v669, %v665
    %v1134 = vpack.c.b16 %v670, %v666
    %v1135 = vpack.c.b16 %v671, %v667
    %v1136 = vpack.c.b16 %v672, %v668
    %v1137 = vpack.c.b16 %v677, %v673
    %v1138 = vpack.c.b16 %v678, %v674
    %v1139 = vpack.c.b16 %v679, %v675
    %v1140 = vpack.c.b16 %v680, %v676
    %v1141 = vpack.c.b16 %v685, %v681
    %v1142 = vpack.c.b16 %v686, %v682
    %v1143 = vpack.c.b16 %v687, %v683
    %v1144 = vpack.c.b16 %v688, %v684
    %v1145 = vpack.c.b16 %v693, %v689
    %v1146 = vpack.c.b16 %v694, %v690
    %v1147 = vpack.c.b16 %v695, %v691
    %v1148 = vpack.c.b16 %v696, %v692
    %v1149 = vpack.c.b16 %v701, %v697
    %v1150 = vpack.c.b16 %v702, %v698
    %v1151 = vpack.c.b16 %v703, %v699
    %v1152 = vpack.c.b16 %v704, %v700
    %v1153 = vpack.c.b16 %v709, %v705
    %v1154 = vpack.c.b16 %v710, %v706
    %v1155 = vpack.c.b16 %v711, %v707
    %v1156 = vpack.c.b16 %v712, %v708
    %v1157 = vpack.c.b16 %v717, %v713
    %v1158 = vpack.c.b16 %v718, %v714
    %v1159 = vpack.c.b16 %v719, %v715
    %v1160 = vpack.c.b16 %v720, %v716
    %v1161 = vpack.c.b16 %v725, %v721
    %v1162 = vpack.c.b16 %v726, %v722
    %v1163 = vpack.c.b16 %v727, %v723
    %v1164 = vpack.c.b16 %v728, %v724
    %v1165 = vpack.c.b16 %v733, %v729
    %v1166 = vpack.c.b16 %v734, %v730
    %v1167 = vpack.c.b16 %v735, %v731
    %v1168 = vpack.c.b16 %v736, %v732
    %v1169 = vpack.c.b16 %v741, %v737
    %v1170 = vpack.c.b16 %v742, %v738
    %v1171 = vpack.c.b16 %v743, %v739
    %v1172 = vpack.c.b16 %v744, %v740
    %v1173 = vpack.c.b16 %v749, %v745
    %v1174 = vpack.c.b16 %v750, %v746
    %v1175 = vpack.c.b16 %v751, %v747
    %v1176 = vpack.c.b16 %v752, %v748
    %v1177 = vpack.c.b16 %v757, %v753
    %v1178 = vpack.c.b16 %v758, %v754
    %v1179 = vpack.c.b16 %v759, %v755
    %v1180 = vpack.c.b16 %v760, %v756
    %v1181 = vpack.c.b16 %v765, %v761
    %v1182 = vpack.c.b16 %v766, %v762
    %v1183 = vpack.c.b16 %v767, %v763
    %v1184 = vpack.c.b16 %v768, %v764
    %v1185 = vpack.c.b16 %v773, %v769
    %v1186 = vpack.c.b16 %v774, %v770
    %v1187 = vpack.c.b16 %v775, %v771
    %v1188 = vpack.c.b16 %v776, %v772
    %v1189 = vpack.c.b16 %v781, %v777
    %v1190 = vpack.c.b16 %v782, %v778
    %v1191 = vpack.c.b16 %v783, %v779
    %v1192 = vpack.c.b16 %v784, %v780
    %v1193 = vpack.c.b16 %v789, %v785
    %v1194 = vpack.c.b16 %v790, %v786
    %v1195 = vpack.c.b16 %v791, %v787
    %v1196 = vpack.c.b16 %v792, %v788
    %v1197 = vpack.c.b16 %v797, %v793
    %v1198 = vpack.c.b16 %v798, %v794
    %v1199 = vpack.c.b16 %v799, %v795
    %v1200 = vpack.c.b16 %v800, %v796
    %v1201 = vpack.c.b16 %v805, %v801
    %v1202 = vpack.c.b16 %v806, %v802
    %v1203 = vpack.c.b16 %v807, %v803
    %v1204 = vpack.c.b16 %v808, %v804
    %v1205 = vpack.c.b16 %v813, %v809
    %v1206 = vpack.c.b16 %v814, %v810
    %v1207 = vpack.c.b16 %v815, %v811
    %v1208 = vpack.c.b16 %v816, %v812
    %v1209 = vpack.c.b16 %v821, %v817
    %v1210 = vpack.c.b16 %v822, %v818
    %v1211 = vpack.c.b16 %v823, %v819
    %v1212 = vpack.c.b16 %v824, %v820
    %v1213 = vpack.c.b16 %v829, %v825
    %v1214 = vpack.c.b16 %v830, %v826
    %v1215 = vpack.c.b16 %v831, %v827
    %v1216 = vpack.c.b16 %v832, %v828
    %v1217 = vpack.c.b16 %v837, %v833
    %v1218 = vpack.c.b16 %v838, %v834
    %v1219 = vpack.c.b16 %v839, %v835
    %v1220 = vpack.c.b16 %v840, %v836
    %v1221 = vpack.c.b16 %v845, %v841
    %v1222 = vpack.c.b16 %v846, %v842
    %v1223 = vpack.c.b16 %v847, %v843
    %v1224 = vpack.c.b16 %v848, %v844
    %v1225 = vpack.c.b16 %v853, %v849
    %v1226 = vpack.c.b16 %v854, %v850
    %v1227 = vpack.c.b16 %v855, %v851
    %v1228 = vpack.c.b16 %v856, %v852
    %v1229 = vpack.c.b16 %v861, %v857
    %v1230 = vpack.c.b16 %v862, %v858
    %v1231 = vpack.c.b16 %v863, %v859
    %v1232 = vpack.c.b16 %v864, %v860
    %v1233 = vpack.c.b16 %v869, %v865
    %v1234 = vpack.c.b16 %v870, %v866
    %v1235 = vpack.c.b16 %v871, %v867
    %v1236 = vpack.c.b16 %v872, %v868
    %v1237 = vpack.c.b16 %v877, %v873
    %v1238 = vpack.c.b16 %v878, %v874
    %v1239 = vpack.c.b16 %v879, %v875
    %v1240 = vpack.c.b16 %v880, %v876
    %v1241 = vpack.c.b16 %v885, %v881
    %v1242 = vpack.c.b16 %v886, %v882
    %v1243 = vpack.c.b16 %v887, %v883
    %v1244 = vpack.c.b16 %v888, %v884
    %v1245 = vpack.c.b16 %v893, %v889
    %v1246 = vpack.c.b16 %v894, %v890
    %v1247 = vpack.c.b16 %v895, %v891
    %v1248 = vpack.c.b16 %v896, %v892
    %v1249 = vpack.c.b16 %v901, %v897
    %v1250 = vpack.c.b16 %v902, %v898
    %v1251 = vpack.c.b16 %v903, %v899
    %v1252 = vpack.c.b16 %v904, %v900
    %v1253 = vpack.c.b16 %v909, %v905
    %v1254 = vpack.c.b16 %v910, %v906
    %v1255 = vpack.c.b16 %v911, %v907
    %v1256 = vpack.c.b16 %v912, %v908
    %v1257 = vpack.c.b16 %v917, %v913
    %v1258 = vpack.c.b16 %v918, %v914
    %v1259 = vpack.c.b16 %v919, %v915
    %v1260 = vpack.c.b16 %v920, %v916
    %v1261 = vpack.c.b16 %v925, %v921
    %v1262 = vpack.c.b16 %v926, %v922
    %v1263 = vpack.c.b16 %v927, %v923
    %v1264 = vpack.c.b16 %v928, %v924
    %v1265 = vpack.c.b16 %v933, %v929
    %v1266 = vpack.c.b16 %v934, %v930
    %v1267 = vpack.c.b16 %v935, %v931
    %v1268 = vpack.c.b16 %v936, %v932
    %v1269 = vpack.c.b16 %v941, %v937
    %v1270 = vpack.c.b16 %v942, %v938
    %v1271 = vpack.c.b16 %v943, %v939
    %v1272 = vpack.c.b16 %v944, %v940
    %v1273 = vpack.c.b16 %v949, %v945
    %v1274 = vpack.c.b16 %v950, %v946
    %v1275 = vpack.c.b16 %v951, %v947
    %v1276 = vpack.c.b16 %v952, %v948
    %v1277 = vpack.c.b16 %v957, %v953
    %v1278 = vpack.c.b16 %v958, %v954
    %v1279 = vpack.c.b16 %v959, %v955
    %v1280 = vpack.c.b16 %v960, %v956
    %v1281 = vpack.c.b16 %v965, %v961
    %v1282 = vpack.c.b16 %v966, %v962
    %v1283 = vpack.c.b16 %v967, %v963
    %v1284 = vpack.c.b16 %v968, %v964
    %v1285 = vpack.c.b16 %v973, %v969
    %v1286 = vpack.c.b16 %v974, %v970
    %v1287 = vpack.c.b16 %v975, %v971
    %v1288 = vpack.c.b16 %v976, %v972
    %v1289 = vpack.c.b16 %v981, %v977
    %v1290 = vpack.c.b16 %v982, %v978
    %v1291 = vpack.c.b16 %v983, %v979
    %v1292 = vpack.c.b16 %v984, %v980
    %v1293 = vpack.c.b16 %v989, %v985
    %v1294 = vpack.c.b16 %v990, %v986
    %v1295 = vpack.c.b16 %v991, %v987
    %v1296 = vpack.c.b16 %v992, %v988
    %v1297 = vpack.c.b16 %v997, %v993
    %v1298 = vpack.c.b16 %v998, %v994
    %v1299 = vpack.c.b16 %v999, %v995
    %v1300 = vpack.c.b16 %v1000, %v996
    %v1301 = vpack.c.b16 %v1005, %v1001
    %v1302 = vpack.c.b16 %v1006, %v1002
    %v1303 = vpack.c.b16 %v1007, %v1003
    %v1304 = vpack.c.b16 %v1008, %v1004
    %v1305 = vpack.c.b16 %v1013, %v1009
    %v1306 = vpack.c.b16 %v1014, %v1010
    %v1307 = vpack.c.b16 %v1015, %v1011
    %v1308 = vpack.c.b16 %v1016, %v1012
    %v1309 = vpack.c.b16 %v1021, %v1017
    %v1310 = vpack.c.b16 %v1022, %v1018
    %v1311 = vpack.c.b16 %v1023, %v1019
    %v1312 = vpack.c.b16 %v1024, %v1020
    %v1313 = vpack.c.b16 %v1029, %v1025
    %v1314 = vpack.c.b16 %v1030, %v1026
    %v1315 = vpack.c.b16 %v1031, %v1027
    %v1316 = vpack.c.b16 %v1032, %v1028
    %v1317 = vpack.c.b16 %v1037, %v1033
    %v1318 = vpack.c.b16 %v1038, %v1034
    %v1319 = vpack.c.b16 %v1039, %v1035
    %v1320 = vpack.c.b16 %v1040, %v1036
    %v1321 = vpack.c.b16 %v1045, %v1041
    %v1322 = vpack.c.b16 %v1046, %v1042
    %v1323 = vpack.c.b16 %v1047, %v1043
    %v1324 = vpack.c.b16 %v1048, %v1044
    %v1325 = vpack.c.b16 %v1053, %v1049
    %v1326 = vpack.c.b16 %v1054, %v1050
    %v1327 = vpack.c.b16 %v1055, %v1051
    %v1328 = vpack.c.b16 %v1056, %v1052
    %v1329 = vpack.c.b16 %v1061, %v1057
    %v1330 = vpack.c.b16 %v1062, %v1058
    %v1331 = vpack.c.b16 %v1063, %v1059
    %v1332 = vpack.c.b16 %v1064, %v1060
    %v1333 = vpack.c.b16 %v1069, %v1065
    %v1334 = vpack.c.b16 %v1070, %v1066
    %v1335 = vpack.c.b16 %v1071, %v1067
    %v1336 = vpack.c.b16 %v1072, %v1068
    %v1337 = vpack.c.b16 %v1077, %v1073
    %v1338 = vpack.c.b16 %v1078, %v1074
    %v1339 = vpack.c.b16 %v1079, %v1075
    %v1340 = vpack.c.b16 %v1080, %v1076
    %v1341 = vpack.c.b16 %v1085, %v1081
    %v1342 = vpack.c.b16 %v1086, %v1082
    %v1343 = vpack.c.b16 %v1087, %v1083
    %v1344 = vpack.c.b16 %v1088, %v1084
    %v1345 = vpack.c.b16 %v1093, %v1089
    %v1346 = vpack.c.b16 %v1094, %v1090
    %v1347 = vpack.c.b16 %v1095, %v1091
    %v1348 = vpack.c.b16 %v1096, %v1092
    %v1349 = vpack.c.b16 %v1097, %v1097
    %v1350 = vpack.c.b16 %v1098, %v1098
    %v1351 = vpack.c.b16 %v1099, %v1099
    %v1352 = vpack.c.b16 %v1100, %v1100
    %vm1601 = vcmask 850944
    %v1603 = vsel %vm1601, %v78, 0
    %vm1605 = vcmask 1043456
    %v1607 = vsel %vm1605, %v1349, 0
    %v1610 = vsel %vm1605, %v1350, 0
    %v1613 = vsel %vm1605, %v1351, 0
    %v1616 = vsel %vm1605, %v1352, 0
    %1618 = vmatprep.subr.bf16.mxu0 %v1130
    %1619 = vmatpush1.bf16.msra.mxu0 %v1129
    %1620 = vmatprep.subr.bf16.mxu0 %v1126
    %1621 = vmatpush1.bf16.msra.mxu0 %v1125
    %1622 = vmatprep.subr.bf16.mxu0 %v1122
    %1623 = vmatpush1.bf16.msra.mxu0 %v1121
    %1624 = vmatprep.subr.bf16.mxu0 %v1118
    %1625 = vmatpush1.bf16.msra.mxu0 %v1117
    %1626 = vmatprep.subr.bf16.mxu0 %v1114
    %1627 = vmatpush1.bf16.msra.mxu0 %v1113
    %1628 = vmatprep.subr.bf16.mxu0 %v1110
    %1629 = vmatpush1.bf16.msra.mxu0 %v1109
    %1630 = vmatprep.subr.bf16.mxu0 %v1106
    %1631 = vmatpush1.bf16.msra.mxu0 %v1105
    %1632 = vmatprep.subr.bf16.mxu0 %v1102
    %1633 = vmatpush1.bf16.msra.mxu0 %v1101
    %1634 = vmatprep.subr.bf16.mxu0 %v1162
    %1635 = vmatpush2.bf16.msra.mxu0 %v1161
    %1636 = vmatprep.subr.bf16.mxu0 %v1158
    %1637 = vmatpush2.bf16.msra.mxu0 %v1157
    %1638 = vmatprep.subr.bf16.mxu0 %v1154
    %1639 = vmatpush2.bf16.msra.mxu0 %v1153
    %1640 = vmatprep.subr.bf16.mxu0 %v1150
    %1641 = vmatpush2.bf16.msra.mxu0 %v1149
    %1642 = vmatprep.subr.bf16.mxu0 %v1146
    %1643 = vmatpush2.bf16.msra.mxu0 %v1145
    %1644 = vmatprep.subr.bf16.mxu0 %v1142
    %1645 = vmatpush2.bf16.msra.mxu0 %v1141
    %1646 = vmatprep.subr.bf16.mxu0 %v1138
    %1647 = vmatpush2.bf16.msra.mxu0 %v1137
    %1648 = vmatprep.subr.bf16.mxu0 %v1134
    %1649 = vmatpush2.bf16.msra.mxu0 %v1133
    %1650 = vmatprep.mubr.bf16.mxu0 %v72
    %1651 = vmatmul.mubr.bf16.gmra.mxu0 %v71
    %v1652 = vpop.f32.mrf.mxu0
    %v1653 = vadd.f32 %v334, %v1652
    %v1654 = vpop.f32.mrf.mxu0
    %v1655 = vadd.f32 %v338, %v1654
    %v1656 = vpop.f32.mrf.mxu0
    %v1657 = vadd.f32 %v334, %v1656
    %v1658 = vpop.f32.mrf.mxu0
    %v1659 = vadd.f32 %v338, %v1658
    %1660 = vdwg.mxu0
    %1661 = vmatprep.subr.bf16.mxu0 %v1194
    %1662 = vmatpush1.bf16.msra.mxu0 %v1193
    %1663 = vmatprep.subr.bf16.mxu0 %v1190
    %1664 = vmatpush1.bf16.msra.mxu0 %v1189
    %1665 = vmatprep.subr.bf16.mxu0 %v1186
    %1666 = vmatpush1.bf16.msra.mxu0 %v1185
    %1667 = vmatprep.subr.bf16.mxu0 %v1182
    %1668 = vmatpush1.bf16.msra.mxu0 %v1181
    %1669 = vmatprep.subr.bf16.mxu0 %v1178
    %1670 = vmatpush1.bf16.msra.mxu0 %v1177
    %1671 = vmatprep.subr.bf16.mxu0 %v1174
    %1672 = vmatpush1.bf16.msra.mxu0 %v1173
    %1673 = vmatprep.subr.bf16.mxu0 %v1170
    %1674 = vmatpush1.bf16.msra.mxu0 %v1169
    %1675 = vmatprep.subr.bf16.mxu0 %v1166
    %1676 = vmatpush1.bf16.msra.mxu0 %v1165
    %1677 = vmatprep.subr.bf16.mxu0 %v1226
    %1678 = vmatpush2.bf16.msra.mxu0 %v1225
    %1679 = vmatprep.subr.bf16.mxu0 %v1222
    %1680 = vmatpush2.bf16.msra.mxu0 %v1221
    %1681 = vmatprep.subr.bf16.mxu0 %v1218
    %1682 = vmatpush2.bf16.msra.mxu0 %v1217
    %1683 = vmatprep.subr.bf16.mxu0 %v1214
    %1684 = vmatpush2.bf16.msra.mxu0 %v1213
    %1685 = vmatprep.subr.bf16.mxu0 %v1210
    %1686 = vmatpush2.bf16.msra.mxu0 %v1209
    %1687 = vmatprep.subr.bf16.mxu0 %v1206
    %1688 = vmatpush2.bf16.msra.mxu0 %v1205
    %1689 = vmatprep.subr.bf16.mxu0 %v1202
    %1690 = vmatpush2.bf16.msra.mxu0 %v1201
    %1691 = vmatprep.subr.bf16.mxu0 %v1198
    %1692 = vmatpush2.bf16.msra.mxu0 %v1197
    %1693 = vmatprep.mubr.bf16.mxu0 %v74
    %1694 = vmatmul.mubr.bf16.gmra.mxu0 %v73
    %v1695 = vpop.f32.mrf.mxu0
    %v1696 = vadd.f32 %v1653, %v1695
    %v1697 = vpop.f32.mrf.mxu0
    %v1698 = vadd.f32 %v1655, %v1697
    %v1699 = vpop.f32.mrf.mxu0
    %v1700 = vadd.f32 %v1657, %v1699
    %v1701 = vpop.f32.mrf.mxu0
    %v1702 = vadd.f32 %v1659, %v1701
    %1703 = vdwg.mxu0
    %1704 = vmatprep.subr.bf16.mxu0 %v1258
    %1705 = vmatpush1.bf16.msra.mxu0 %v1257
    %1706 = vmatprep.subr.bf16.mxu0 %v1254
    %1707 = vmatpush1.bf16.msra.mxu0 %v1253
    %1708 = vmatprep.subr.bf16.mxu0 %v1250
    %1709 = vmatpush1.bf16.msra.mxu0 %v1249
    %1710 = vmatprep.subr.bf16.mxu0 %v1246
    %1711 = vmatpush1.bf16.msra.mxu0 %v1245
    %1712 = vmatprep.subr.bf16.mxu0 %v1242
    %1713 = vmatpush1.bf16.msra.mxu0 %v1241
    %1714 = vmatprep.subr.bf16.mxu0 %v1238
    %1715 = vmatpush1.bf16.msra.mxu0 %v1237
    %1716 = vmatprep.subr.bf16.mxu0 %v1234
    %1717 = vmatpush1.bf16.msra.mxu0 %v1233
    %1718 = vmatprep.subr.bf16.mxu0 %v1230
    %1719 = vmatpush1.bf16.msra.mxu0 %v1229
    %1720 = vmatprep.subr.bf16.mxu0 %v1290
    %1721 = vmatpush2.bf16.msra.mxu0 %v1289
    %1722 = vmatprep.subr.bf16.mxu0 %v1286
    %1723 = vmatpush2.bf16.msra.mxu0 %v1285
    %1724 = vmatprep.subr.bf16.mxu0 %v1282
    %1725 = vmatpush2.bf16.msra.mxu0 %v1281
    %1726 = vmatprep.subr.bf16.mxu0 %v1278
    %1727 = vmatpush2.bf16.msra.mxu0 %v1277
    %1728 = vmatprep.subr.bf16.mxu0 %v1274
    %1729 = vmatpush2.bf16.msra.mxu0 %v1273
    %1730 = vmatprep.subr.bf16.mxu0 %v1270
    %1731 = vmatpush2.bf16.msra.mxu0 %v1269
    %1732 = vmatprep.subr.bf16.mxu0 %v1266
    %1733 = vmatpush2.bf16.msra.mxu0 %v1265
    %1734 = vmatprep.subr.bf16.mxu0 %v1262
    %1735 = vmatpush2.bf16.msra.mxu0 %v1261
    %1736 = vmatprep.mubr.bf16.mxu0 %v76
    %1737 = vmatmul.mubr.bf16.gmra.mxu0 %v75
    %v1738 = vpop.f32.mrf.mxu0
    %v1739 = vadd.f32 %v1696, %v1738
    %v1740 = vpop.f32.mrf.mxu0
    %v1741 = vadd.f32 %v1698, %v1740
    %v1742 = vpop.f32.mrf.mxu0
    %v1743 = vadd.f32 %v1700, %v1742
    %v1744 = vpop.f32.mrf.mxu0
    %v1745 = vadd.f32 %v1702, %v1744
    %1746 = vdwg.mxu0
    %1747 = vmatprep.subr.bf16.mxu0 %v1322
    %1748 = vmatpush1.bf16.msra.mxu0 %v1321
    %1749 = vmatprep.subr.bf16.mxu0 %v1318
    %1750 = vmatpush1.bf16.msra.mxu0 %v1317
    %1751 = vmatprep.subr.bf16.mxu0 %v1314
    %1752 = vmatpush1.bf16.msra.mxu0 %v1313
    %1753 = vmatprep.subr.bf16.mxu0 %v1310
    %1754 = vmatpush1.bf16.msra.mxu0 %v1309
    %1755 = vmatprep.subr.bf16.mxu0 %v1306
    %1756 = vmatpush1.bf16.msra.mxu0 %v1305
    %1757 = vmatprep.subr.bf16.mxu0 %v1302
    %1758 = vmatpush1.bf16.msra.mxu0 %v1301
    %1759 = vmatprep.subr.bf16.mxu0 %v1298
    %1760 = vmatpush1.bf16.msra.mxu0 %v1297
    %1761 = vmatprep.subr.bf16.mxu0 %v1294
    %1762 = vmatpush1.bf16.msra.mxu0 %v1293
    %1763 = vmatprep.subr.bf16.mxu0 0
    %1764 = vmatpush2.bf16.msra.mxu0 0
    %1765 = vmatprep.subr.bf16.mxu0 %v1610
    %1766 = vmatpush2.bf16.msra.mxu0 %v1607
    %1767 = vmatprep.subr.bf16.mxu0 %v1346
    %1768 = vmatpush2.bf16.msra.mxu0 %v1345
    %1769 = vmatprep.subr.bf16.mxu0 %v1342
    %1770 = vmatpush2.bf16.msra.mxu0 %v1341
    %1771 = vmatprep.subr.bf16.mxu0 %v1338
    %1772 = vmatpush2.bf16.msra.mxu0 %v1337
    %1773 = vmatprep.subr.bf16.mxu0 %v1334
    %1774 = vmatpush2.bf16.msra.mxu0 %v1333
    %1775 = vmatprep.subr.bf16.mxu0 %v1330
    %1776 = vmatpush2.bf16.msra.mxu0 %v1329
    %1777 = vmatprep.subr.bf16.mxu0 %v1326
    %1778 = vmatpush2.bf16.msra.mxu0 %v1325
    %1779 = vmatprep.mubr.bf16.mxu0 %v1603
    %1780 = vmatmul.mubr.bf16.gmra.mxu0 %v77
    %v1781 = vpop.f32.mrf.mxu0
    %v1782 = vadd.f32 %v1739, %v1781
    %v1783 = vpop.f32.mrf.mxu0
    %v1784 = vadd.f32 %v1741, %v1783
    %v1785 = vpop.f32.mrf.mxu0
    %v1786 = vadd.f32 %v1743, %v1785
    %v1787 = vpop.f32.mrf.mxu0
    %v1788 = vadd.f32 %v1745, %v1787
    %1789 = vdwg.mxu0
    %1790 = vmatprep.subr.bf16.mxu0 %v1132
    %1791 = vmatpush1.bf16.msra.mxu0 %v1131
    %1792 = vmatprep.subr.bf16.mxu0 %v1128
    %1793 = vmatpush1.bf16.msra.mxu0 %v1127
    %1794 = vmatprep.subr.bf16.mxu0 %v1124
    %1795 = vmatpush1.bf16.msra.mxu0 %v1123
    %1796 = vmatprep.subr.bf16.mxu0 %v1120
    %1797 = vmatpush1.bf16.msra.mxu0 %v1119
    %1798 = vmatprep.subr.bf16.mxu0 %v1116
    %1799 = vmatpush1.bf16.msra.mxu0 %v1115
    %1800 = vmatprep.subr.bf16.mxu0 %v1112
    %1801 = vmatpush1.bf16.msra.mxu0 %v1111
    %1802 = vmatprep.subr.bf16.mxu0 %v1108
    %1803 = vmatpush1.bf16.msra.mxu0 %v1107
    %1804 = vmatprep.subr.bf16.mxu0 %v1104
    %1805 = vmatpush1.bf16.msra.mxu0 %v1103
    %1806 = vmatprep.subr.bf16.mxu0 %v1164
    %1807 = vmatpush2.bf16.msra.mxu0 %v1163
    %1808 = vmatprep.subr.bf16.mxu0 %v1160
    %1809 = vmatpush2.bf16.msra.mxu0 %v1159
    %1810 = vmatprep.subr.bf16.mxu0 %v1156
    %1811 = vmatpush2.bf16.msra.mxu0 %v1155
    %1812 = vmatprep.subr.bf16.mxu0 %v1152
    %1813 = vmatpush2.bf16.msra.mxu0 %v1151
    %1814 = vmatprep.subr.bf16.mxu0 %v1148
    %1815 = vmatpush2.bf16.msra.mxu0 %v1147
    %1816 = vmatprep.subr.bf16.mxu0 %v1144
    %1817 = vmatpush2.bf16.msra.mxu0 %v1143
    %1818 = vmatprep.subr.bf16.mxu0 %v1140
    %1819 = vmatpush2.bf16.msra.mxu0 %v1139
    %1820 = vmatprep.subr.bf16.mxu0 %v1136
    %1821 = vmatpush2.bf16.msra.mxu0 %v1135
    %1822 = vmatprep.mubr.bf16.mxu0 %v72
    %1823 = vmatmul.mubr.bf16.gmra.mxu0 %v71
    %v1824 = vpop.f32.mrf.mxu0
    %v1825 = vadd.f32 %v342, %v1824
    %v1826 = vpop.f32.mrf.mxu0
    %v1827 = vadd.f32 %v346, %v1826
    %v1828 = vpop.f32.mrf.mxu0
    %v1829 = vadd.f32 %v342, %v1828
    %v1830 = vpop.f32.mrf.mxu0
    %v1831 = vadd.f32 %v346, %v1830
    %1832 = vdwg.mxu0
    %1833 = vmatprep.subr.bf16.mxu0 %v1196
    %1834 = vmatpush1.bf16.msra.mxu0 %v1195
    %1835 = vmatprep.subr.bf16.mxu0 %v1192
    %1836 = vmatpush1.bf16.msra.mxu0 %v1191
    %1837 = vmatprep.subr.bf16.mxu0 %v1188
    %1838 = vmatpush1.bf16.msra.mxu0 %v1187
    %1839 = vmatprep.subr.bf16.mxu0 %v1184
    %1840 = vmatpush1.bf16.msra.mxu0 %v1183
    %1841 = vmatprep.subr.bf16.mxu0 %v1180
    %1842 = vmatpush1.bf16.msra.mxu0 %v1179
    %1843 = vmatprep.subr.bf16.mxu0 %v1176
    %1844 = vmatpush1.bf16.msra.mxu0 %v1175
    %1845 = vmatprep.subr.bf16.mxu0 %v1172
    %1846 = vmatpush1.bf16.msra.mxu0 %v1171
    %1847 = vmatprep.subr.bf16.mxu0 %v1168
    %1848 = vmatpush1.bf16.msra.mxu0 %v1167
    %1849 = vmatprep.subr.bf16.mxu0 %v1228
    %1850 = vmatpush2.bf16.msra.mxu0 %v1227
    %1851 = vmatprep.subr.bf16.mxu0 %v1224
    %1852 = vmatpush2.bf16.msra.mxu0 %v1223
    %1853 = vmatprep.subr.bf16.mxu0 %v1220
    %1854 = vmatpush2.bf16.msra.mxu0 %v1219
    %1855 = vmatprep.subr.bf16.mxu0 %v1216
    %1856 = vmatpush2.bf16.msra.mxu0 %v1215
    %1857 = vmatprep.subr.bf16.mxu0 %v1212
    %1858 = vmatpush2.bf16.msra.mxu0 %v1211
    %1859 = vmatprep.subr.bf16.mxu0 %v1208
    %1860 = vmatpush2.bf16.msra.mxu0 %v1207
    %1861 = vmatprep.subr.bf16.mxu0 %v1204
    %1862 = vmatpush2.bf16.msra.mxu0 %v1203
    %1863 = vmatprep.subr.bf16.mxu0 %v1200
    %1864 = vmatpush2.bf16.msra.mxu0 %v1199
    %1865 = vmatprep.mubr.bf16.mxu0 %v74
    %1866 = vmatmul.mubr.bf16.gmra.mxu0 %v73
    %v1867 = vpop.f32.mrf.mxu0
    %v1868 = vadd.f32 %v1825, %v1867
    %v1869 = vpop.f32.mrf.mxu0
    %v1870 = vadd.f32 %v1827, %v1869
    %v1871 = vpop.f32.mrf.mxu0
    %v1872 = vadd.f32 %v1829, %v1871
    %v1873 = vpop.f32.mrf.mxu0
    %v1874 = vadd.f32 %v1831, %v1873
    %1875 = vdwg.mxu0
    %1876 = vmatprep.subr.bf16.mxu0 %v1260
    %1877 = vmatpush1.bf16.msra.mxu0 %v1259
    %1878 = vmatprep.subr.bf16.mxu0 %v1256
    %1879 = vmatpush1.bf16.msra.mxu0 %v1255
    %1880 = vmatprep.subr.bf16.mxu0 %v1252
    %1881 = vmatpush1.bf16.msra.mxu0 %v1251
    %1882 = vmatprep.subr.bf16.mxu0 %v1248
    %1883 = vmatpush1.bf16.msra.mxu0 %v1247
    %1884 = vmatprep.subr.bf16.mxu0 %v1244
    %1885 = vmatpush1.bf16.msra.mxu0 %v1243
    %1886 = vmatprep.subr.bf16.mxu0 %v1240
    %1887 = vmatpush1.bf16.msra.mxu0 %v1239
    %1888 = vmatprep.subr.bf16.mxu0 %v1236
    %1889 = vmatpush1.bf16.msra.mxu0 %v1235
    %1890 = vmatprep.subr.bf16.mxu0 %v1232
    %1891 = vmatpush1.bf16.msra.mxu0 %v1231
    %1892 = vmatprep.subr.bf16.mxu0 %v1292
    %1893 = vmatpush2.bf16.msra.mxu0 %v1291
    %1894 = vmatprep.subr.bf16.mxu0 %v1288
    %1895 = vmatpush2.bf16.msra.mxu0 %v1287
    %1896 = vmatprep.subr.bf16.mxu0 %v1284
    %1897 = vmatpush2.bf16.msra.mxu0 %v1283
    %1898 = vmatprep.subr.bf16.mxu0 %v1280
    %1899 = vmatpush2.bf16.msra.mxu0 %v1279
    %1900 = vmatprep.subr.bf16.mxu0 %v1276
    %1901 = vmatpush2.bf16.msra.mxu0 %v1275
    %1902 = vmatprep.subr.bf16.mxu0 %v1272
    %1903 = vmatpush2.bf16.msra.mxu0 %v1271
    %1904 = vmatprep.subr.bf16.mxu0 %v1268
    %1905 = vmatpush2.bf16.msra.mxu0 %v1267
    %1906 = vmatprep.subr.bf16.mxu0 %v1264
    %1907 = vmatpush2.bf16.msra.mxu0 %v1263
    %1908 = vmatprep.mubr.bf16.mxu0 %v76
    %1909 = vmatmul.mubr.bf16.gmra.mxu0 %v75
    %v1910 = vpop.f32.mrf.mxu0
    %v1911 = vadd.f32 %v1868, %v1910
    %v1912 = vpop.f32.mrf.mxu0
    %v1913 = vadd.f32 %v1870, %v1912
    %v1914 = vpop.f32.mrf.mxu0
    %v1915 = vadd.f32 %v1872, %v1914
    %v1916 = vpop.f32.mrf.mxu0
    %v1917 = vadd.f32 %v1874, %v1916
    %1918 = vdwg.mxu0
    %1919 = vmatprep.subr.bf16.mxu0 %v1324
    %1920 = vmatpush1.bf16.msra.mxu0 %v1323
    %1921 = vmatprep.subr.bf16.mxu0 %v1320
    %1922 = vmatpush1.bf16.msra.mxu0 %v1319
    %1923 = vmatprep.subr.bf16.mxu0 %v1316
    %1924 = vmatpush1.bf16.msra.mxu0 %v1315
    %1925 = vmatprep.subr.bf16.mxu0 %v1312
    %1926 = vmatpush1.bf16.msra.mxu0 %v1311
    %1927 = vmatprep.subr.bf16.mxu0 %v1308
    %1928 = vmatpush1.bf16.msra.mxu0 %v1307
    %1929 = vmatprep.subr.bf16.mxu0 %v1304
    %1930 = vmatpush1.bf16.msra.mxu0 %v1303
    %1931 = vmatprep.subr.bf16.mxu0 %v1300
    %1932 = vmatpush1.bf16.msra.mxu0 %v1299
    %1933 = vmatprep.subr.bf16.mxu0 %v1296
    %1934 = vmatpush1.bf16.msra.mxu0 %v1295
    %1935 = vmatprep.subr.bf16.mxu0 0
    %1936 = vmatpush2.bf16.msra.mxu0 0
    %1937 = vmatprep.subr.bf16.mxu0 %v1616
    %1938 = vmatpush2.bf16.msra.mxu0 %v1613
    %1939 = vmatprep.subr.bf16.mxu0 %v1348
    %1940 = vmatpush2.bf16.msra.mxu0 %v1347
    %1941 = vmatprep.subr.bf16.mxu0 %v1344
    %1942 = vmatpush2.bf16.msra.mxu0 %v1343
    %1943 = vmatprep.subr.bf16.mxu0 %v1340
    %1944 = vmatpush2.bf16.msra.mxu0 %v1339
    %1945 = vmatprep.subr.bf16.mxu0 %v1336
    %1946 = vmatpush2.bf16.msra.mxu0 %v1335
    %1947 = vmatprep.subr.bf16.mxu0 %v1332
    %1948 = vmatpush2.bf16.msra.mxu0 %v1331
    %1949 = vmatprep.subr.bf16.mxu0 %v1328
    %1950 = vmatpush2.bf16.msra.mxu0 %v1327
    %1951 = vmatprep.mubr.bf16.mxu0 %v1603
    %1952 = vmatmul.mubr.bf16.gmra.mxu0 %v77
    %v1953 = vpop.f32.mrf.mxu0
    %v1954 = vadd.f32 %v1911, %v1953
    %v1955 = vpop.f32.mrf.mxu0
    %v1956 = vadd.f32 %v1913, %v1955
    %v1957 = vpop.f32.mrf.mxu0
    %v1958 = vadd.f32 %v1915, %v1957
    %v1959 = vpop.f32.mrf.mxu0
    %v1960 = vadd.f32 %v1917, %v1959
    %1961 = vdwg.mxu0
    %v1962 = vmax.f32 %v1782, 0.0
    %v1963 = vmax.f32 %v1784, 0.0
    %v1964 = vmax.f32 %v1954, 0.0
    %v1965 = vmax.f32 %v1956, 0.0
    %v1966 = vmax.f32 %v1786, 0.0
    %v1967 = vmax.f32 %v1788, 0.0
    %v1968 = vmax.f32 %v1958, 0.0
    %v1969 = vmax.f32 %v1960, 0.0
    %v1970 = vpack.c.bf16 %v1966, %v1962
    %v1971 = vpack.c.bf16 %v1967, %v1963
    %v1972 = vpack.c.bf16 %v1968, %v1964
    %v1973 = vpack.c.bf16 %v1969, %v1965
    %v1974 = vld [vmem:[#allocation4] sm:$0xff]
    %v1975 = vld [vmem:[#allocation4 + $0x8] sm:$0xff]
    %v1976 = vld [vmem:[#allocation4 + $0x10] sm:$0xff]
    %v1977 = vld [vmem:[#allocation4 + $0x18] sm:$0xff]
    %v1978 = vld [vmem:[#allocation4 + $0x20] sm:$0xff]
    %v1979 = vld [vmem:[#allocation4 + $0x28] sm:$0xff]
    %v1980 = vld [vmem:[#allocation4 + $0x30] sm:$0xff]
    %v1981 = vld [vmem:[#allocation4 + $0x38] sm:$0xff]
    %v1982 = vld [vmem:[#allocation4 + $0x40] sm:$0xff]
    %v1983 = vld [vmem:[#allocation4 + $0x48] sm:$0xff]
    %v1984 = vld [vmem:[#allocation4 + $0x50] sm:$0xff]
    %v1985 = vld [vmem:[#allocation4 + $0x58] sm:$0xff]
    %v1986 = vld [vmem:[#allocation4 + $0x60] sm:$0xff]
    %v1987 = vld [vmem:[#allocation4 + $0x68] sm:$0xff]
    %v1988 = vld [vmem:[#allocation4 + $0x70] sm:$0xff]
    %v1989 = vld [vmem:[#allocation4 + $0x78] sm:$0xff]
    %v1990 = vld [vmem:[#allocation4 + $0x80] sm:$0xff]
    %v1991 = vld [vmem:[#allocation4 + $0x88] sm:$0xff]
    %v1992 = vld [vmem:[#allocation4 + $0x90] sm:$0xff]
    %v1993 = vld [vmem:[#allocation4 + $0x98] sm:$0xff]
    %v1994 = vld [vmem:[#allocation4 + $0xa0] sm:$0xff]
    %v1995 = vld [vmem:[#allocation4 + $0xa8] sm:$0xff]
    %v1996 = vld [vmem:[#allocation4 + $0xb0] sm:$0xff]
    %v1997 = vld [vmem:[#allocation4 + $0xb8] sm:$0xff]
    %v1998 = vld [vmem:[#allocation4 + $0xc0] sm:$0xff]
    %v1999 = vld [vmem:[#allocation4 + $0xc8] sm:$0xff]
    %v2000 = vld [vmem:[#allocation4 + $0xd0] sm:$0xff]
    %v2001 = vld [vmem:[#allocation4 + $0xd8] sm:$0xff]
    %v2002 = vld [vmem:[#allocation4 + $0xe0] sm:$0xff]
    %v2003 = vld [vmem:[#allocation4 + $0xe8] sm:$0xff]
    %v2004 = vld [vmem:[#allocation4 + $0xf0] sm:$0xff]
    %v2005 = vld [vmem:[#allocation4 + $0xf8] sm:$0xff]
    %v2006 = vld [vmem:[#allocation4 + $0x100] sm:$0xff]
    %v2007 = vld [vmem:[#allocation4 + $0x108] sm:$0xff]
    %v2008 = vld [vmem:[#allocation4 + $0x110] sm:$0xff]
    %v2009 = vld [vmem:[#allocation4 + $0x118] sm:$0xff]
    %v2010 = vld [vmem:[#allocation4 + $0x120] sm:$0xff]
    %v2011 = vld [vmem:[#allocation4 + $0x128] sm:$0xff]
    %v2012 = vld [vmem:[#allocation4 + $0x130] sm:$0xff]
    %v2013 = vld [vmem:[#allocation4 + $0x138] sm:$0xff]
    %v2014 = vld [vmem:[#allocation4 + $0x140] sm:$0xff]
    %v2015 = vld [vmem:[#allocation4 + $0x148] sm:$0xff]
    %v2016 = vld [vmem:[#allocation4 + $0x150] sm:$0xff]
    %v2017 = vld [vmem:[#allocation4 + $0x158] sm:$0xff]
    %v2018 = vld [vmem:[#allocation4 + $0x160] sm:$0xff]
    %v2019 = vld [vmem:[#allocation4 + $0x168] sm:$0xff]
    %v2020 = vld [vmem:[#allocation4 + $0x170] sm:$0xff]
    %v2021 = vld [vmem:[#allocation4 + $0x178] sm:$0xff]
    %v2022 = vld [vmem:[#allocation4 + $0x180] sm:$0xff]
    %v2023 = vld [vmem:[#allocation4 + $0x188] sm:$0xff]
    %v2024 = vld [vmem:[#allocation4 + $0x190] sm:$0xff]
    %v2025 = vld [vmem:[#allocation4 + $0x198] sm:$0xff]
    %v2026 = vld [vmem:[#allocation4 + $0x1a0] sm:$0xff]
    %v2027 = vld [vmem:[#allocation4 + $0x1a8] sm:$0xff]
    %v2028 = vld [vmem:[#allocation4 + $0x1b0] sm:$0xff]
    %v2029 = vld [vmem:[#allocation4 + $0x1b8] sm:$0xff]
    %v2030 = vld [vmem:[#allocation4 + $0x1c0] sm:$0xff]
    %v2031 = vld [vmem:[#allocation4 + $0x1c8] sm:$0xff]
    %v2032 = vld [vmem:[#allocation4 + $0x1d0] sm:$0xff]
    %v2033 = vld [vmem:[#allocation4 + $0x1d8] sm:$0xff]
    %v2034 = vld [vmem:[#allocation4 + $0x1e0] sm:$0xff]
    %v2035 = vld [vmem:[#allocation4 + $0x1e8] sm:$0xff]
    %v2036 = vld [vmem:[#allocation4 + $0x1f0] sm:$0xff]
    %v2037 = vld [vmem:[#allocation4 + $0x1f8] sm:$0xff]
    %v2038 = vld [vmem:[%s4] sm:$0x3]
    %v2040 = vlaneseq
    %v2041 = vshrl.u32 %v2040, 7
    %v2042 = vsub.s32 0, %v2041
    %v2043 = vrot.slane %v2038, %v2042
    %v2044 = vlaneseq
    %v2045 = vshrl.u32 %v2044, 7
    %v2046 = vsub.s32 1, %v2045
    %v2047 = vrot.slane %v2038, %v2046
    %v2114 = vunpack.c.l.b16 %v1974
    %v2115 = vunpack.c.h.b16 %v1974
    %v2116 = vunpack.c.l.b16 %v1975
    %v2117 = vunpack.c.h.b16 %v1975
    %v2118 = vunpack.c.l.b16 %v1976
    %v2119 = vunpack.c.h.b16 %v1976
    %v2120 = vunpack.c.l.b16 %v1977
    %v2121 = vunpack.c.h.b16 %v1977
    %v2122 = vunpack.c.l.b16 %v1978
    %v2123 = vunpack.c.h.b16 %v1978
    %v2124 = vunpack.c.l.b16 %v1979
    %v2125 = vunpack.c.h.b16 %v1979
    %v2126 = vunpack.c.l.b16 %v1980
    %v2127 = vunpack.c.h.b16 %v1980
    %v2128 = vunpack.c.l.b16 %v1981
    %v2129 = vunpack.c.h.b16 %v1981
    %v2130 = vunpack.c.l.b16 %v1982
    %v2131 = vunpack.c.h.b16 %v1982
    %v2132 = vunpack.c.l.b16 %v1983
    %v2133 = vunpack.c.h.b16 %v1983
    %v2134 = vunpack.c.l.b16 %v1984
    %v2135 = vunpack.c.h.b16 %v1984
    %v2136 = vunpack.c.l.b16 %v1985
    %v2137 = vunpack.c.h.b16 %v1985
    %v2138 = vunpack.c.l.b16 %v1986
    %v2139 = vunpack.c.h.b16 %v1986
    %v2140 = vunpack.c.l.b16 %v1987
    %v2141 = vunpack.c.h.b16 %v1987
    %v2142 = vunpack.c.l.b16 %v1988
    %v2143 = vunpack.c.h.b16 %v1988
    %v2144 = vunpack.c.l.b16 %v1989
    %v2145 = vunpack.c.h.b16 %v1989
    %v2146 = vunpack.c.l.b16 %v1990
    %v2147 = vunpack.c.h.b16 %v1990
    %v2148 = vunpack.c.l.b16 %v1991
    %v2149 = vunpack.c.h.b16 %v1991
    %v2150 = vunpack.c.l.b16 %v1992
    %v2151 = vunpack.c.h.b16 %v1992
    %v2152 = vunpack.c.l.b16 %v1993
    %v2153 = vunpack.c.h.b16 %v1993
    %v2154 = vunpack.c.l.b16 %v1994
    %v2155 = vunpack.c.h.b16 %v1994
    %v2156 = vunpack.c.l.b16 %v1995
    %v2157 = vunpack.c.h.b16 %v1995
    %v2158 = vunpack.c.l.b16 %v1996
    %v2159 = vunpack.c.h.b16 %v1996
    %v2160 = vunpack.c.l.b16 %v1997
    %v2161 = vunpack.c.h.b16 %v1997
    %v2162 = vunpack.c.l.b16 %v1998
    %v2163 = vunpack.c.h.b16 %v1998
    %v2164 = vunpack.c.l.b16 %v1999
    %v2165 = vunpack.c.h.b16 %v1999
    %v2166 = vunpack.c.l.b16 %v2000
    %v2167 = vunpack.c.h.b16 %v2000
    %v2168 = vunpack.c.l.b16 %v2001
    %v2169 = vunpack.c.h.b16 %v2001
    %v2170 = vunpack.c.l.b16 %v2002
    %v2171 = vunpack.c.h.b16 %v2002
    %v2172 = vunpack.c.l.b16 %v2003
    %v2173 = vunpack.c.h.b16 %v2003
    %v2174 = vunpack.c.l.b16 %v2004
    %v2175 = vunpack.c.h.b16 %v2004
    %v2176 = vunpack.c.l.b16 %v2005
    %v2177 = vunpack.c.h.b16 %v2005
    %v2178 = vunpack.c.l.b16 %v2006
    %v2179 = vunpack.c.h.b16 %v2006
    %v2180 = vunpack.c.l.b16 %v2007
    %v2181 = vunpack.c.h.b16 %v2007
    %v2182 = vunpack.c.l.b16 %v2008
    %v2183 = vunpack.c.h.b16 %v2008
    %v2184 = vunpack.c.l.b16 %v2009
    %v2185 = vunpack.c.h.b16 %v2009
    %v2186 = vunpack.c.l.b16 %v2010
    %v2187 = vunpack.c.h.b16 %v2010
    %v2188 = vunpack.c.l.b16 %v2011
    %v2189 = vunpack.c.h.b16 %v2011
    %v2190 = vunpack.c.l.b16 %v2012
    %v2191 = vunpack.c.h.b16 %v2012
    %v2192 = vunpack.c.l.b16 %v2013
    %v2193 = vunpack.c.h.b16 %v2013
    %v2194 = vunpack.c.l.b16 %v2014
    %v2195 = vunpack.c.h.b16 %v2014
    %v2196 = vunpack.c.l.b16 %v2015
    %v2197 = vunpack.c.h.b16 %v2015
    %v2198 = vunpack.c.l.b16 %v2016
    %v2199 = vunpack.c.h.b16 %v2016
    %v2200 = vunpack.c.l.b16 %v2017
    %v2201 = vunpack.c.h.b16 %v2017
    %v2202 = vunpack.c.l.b16 %v2018
    %v2203 = vunpack.c.h.b16 %v2018
    %v2204 = vunpack.c.l.b16 %v2019
    %v2205 = vunpack.c.h.b16 %v2019
    %v2206 = vunpack.c.l.b16 %v2020
    %v2207 = vunpack.c.h.b16 %v2020
    %v2208 = vunpack.c.l.b16 %v2021
    %v2209 = vunpack.c.h.b16 %v2021
    %v2210 = vunpack.c.l.b16 %v2022
    %v2211 = vunpack.c.h.b16 %v2022
    %v2212 = vunpack.c.l.b16 %v2023
    %v2213 = vunpack.c.h.b16 %v2023
    %v2214 = vunpack.c.l.b16 %v2024
    %v2215 = vunpack.c.h.b16 %v2024
    %v2216 = vunpack.c.l.b16 %v2025
    %v2217 = vunpack.c.h.b16 %v2025
    %v2218 = vunpack.c.l.b16 %v2026
    %v2219 = vunpack.c.h.b16 %v2026
    %v2220 = vunpack.c.l.b16 %v2027
    %v2221 = vunpack.c.h.b16 %v2027
    %v2222 = vunpack.c.l.b16 %v2028
    %v2223 = vunpack.c.h.b16 %v2028
    %v2224 = vunpack.c.l.b16 %v2029
    %v2225 = vunpack.c.h.b16 %v2029
    %v2226 = vunpack.c.l.b16 %v2030
    %v2227 = vunpack.c.h.b16 %v2030
    %v2228 = vunpack.c.l.b16 %v2031
    %v2229 = vunpack.c.h.b16 %v2031
    %v2230 = vunpack.c.l.b16 %v2032
    %v2231 = vunpack.c.h.b16 %v2032
    %v2232 = vunpack.c.l.b16 %v2033
    %v2233 = vunpack.c.h.b16 %v2033
    %v2234 = vunpack.c.l.b16 %v2034
    %v2235 = vunpack.c.h.b16 %v2034
    %v2236 = vunpack.c.l.b16 %v2035
    %v2237 = vunpack.c.h.b16 %v2035
    %v2238 = vunpack.c.l.b16 %v2036
    %v2239 = vunpack.c.h.b16 %v2036
    %v2240 = vunpack.c.l.b16 %v2037
    %v2241 = vunpack.c.h.b16 %v2037
    %v2242 = vpack.c.b16 %v2116, %v2114
    %v2243 = vpack.c.b16 %v2117, %v2115
    %v2244 = vpack.c.b16 %v2120, %v2118
    %v2245 = vpack.c.b16 %v2121, %v2119
    %v2246 = vpack.c.b16 %v2124, %v2122
    %v2247 = vpack.c.b16 %v2125, %v2123
    %v2248 = vpack.c.b16 %v2128, %v2126
    %v2249 = vpack.c.b16 %v2129, %v2127
    %v2250 = vpack.c.b16 %v2132, %v2130
    %v2251 = vpack.c.b16 %v2133, %v2131
    %v2252 = vpack.c.b16 %v2136, %v2134
    %v2253 = vpack.c.b16 %v2137, %v2135
    %v2254 = vpack.c.b16 %v2140, %v2138
    %v2255 = vpack.c.b16 %v2141, %v2139
    %v2256 = vpack.c.b16 %v2144, %v2142
    %v2257 = vpack.c.b16 %v2145, %v2143
    %v2258 = vpack.c.b16 %v2148, %v2146
    %v2259 = vpack.c.b16 %v2149, %v2147
    %v2260 = vpack.c.b16 %v2152, %v2150
    %v2261 = vpack.c.b16 %v2153, %v2151
    %v2262 = vpack.c.b16 %v2156, %v2154
    %v2263 = vpack.c.b16 %v2157, %v2155
    %v2264 = vpack.c.b16 %v2160, %v2158
    %v2265 = vpack.c.b16 %v2161, %v2159
    %v2266 = vpack.c.b16 %v2164, %v2162
    %v2267 = vpack.c.b16 %v2165, %v2163
    %v2268 = vpack.c.b16 %v2168, %v2166
    %v2269 = vpack.c.b16 %v2169, %v2167
    %v2270 = vpack.c.b16 %v2172, %v2170
    %v2271 = vpack.c.b16 %v2173, %v2171
    %v2272 = vpack.c.b16 %v2176, %v2174
    %v2273 = vpack.c.b16 %v2177, %v2175
    %v2274 = vpack.c.b16 %v2180, %v2178
    %v2275 = vpack.c.b16 %v2181, %v2179
    %v2276 = vpack.c.b16 %v2184, %v2182
    %v2277 = vpack.c.b16 %v2185, %v2183
    %v2278 = vpack.c.b16 %v2188, %v2186
    %v2279 = vpack.c.b16 %v2189, %v2187
    %v2280 = vpack.c.b16 %v2192, %v2190
    %v2281 = vpack.c.b16 %v2193, %v2191
    %v2282 = vpack.c.b16 %v2196, %v2194
    %v2283 = vpack.c.b16 %v2197, %v2195
    %v2284 = vpack.c.b16 %v2200, %v2198
    %v2285 = vpack.c.b16 %v2201, %v2199
    %v2286 = vpack.c.b16 %v2204, %v2202
    %v2287 = vpack.c.b16 %v2205, %v2203
    %v2288 = vpack.c.b16 %v2208, %v2206
    %v2289 = vpack.c.b16 %v2209, %v2207
    %v2290 = vpack.c.b16 %v2212, %v2210
    %v2291 = vpack.c.b16 %v2213, %v2211
    %v2292 = vpack.c.b16 %v2216, %v2214
    %v2293 = vpack.c.b16 %v2217, %v2215
    %v2294 = vpack.c.b16 %v2220, %v2218
    %v2295 = vpack.c.b16 %v2221, %v2219
    %v2296 = vpack.c.b16 %v2224, %v2222
    %v2297 = vpack.c.b16 %v2225, %v2223
    %v2298 = vpack.c.b16 %v2228, %v2226
    %v2299 = vpack.c.b16 %v2229, %v2227
    %v2300 = vpack.c.b16 %v2232, %v2230
    %v2301 = vpack.c.b16 %v2233, %v2231
    %v2302 = vpack.c.b16 %v2236, %v2234
    %v2303 = vpack.c.b16 %v2237, %v2235
    %v2304 = vpack.c.b16 %v2240, %v2238
    %v2305 = vpack.c.b16 %v2241, %v2239
    %2370 = vmatprep.subr.bf16.mxu0 %v2257
    %2371 = vmatpush1.bf16.msra.mxu0 %v2256
    %2372 = vmatprep.subr.bf16.mxu0 %v2255
    %2373 = vmatpush1.bf16.msra.mxu0 %v2254
    %2374 = vmatprep.subr.bf16.mxu0 %v2253
    %2375 = vmatpush1.bf16.msra.mxu0 %v2252
    %2376 = vmatprep.subr.bf16.mxu0 %v2251
    %2377 = vmatpush1.bf16.msra.mxu0 %v2250
    %2378 = vmatprep.subr.bf16.mxu0 %v2249
    %2379 = vmatpush1.bf16.msra.mxu0 %v2248
    %2380 = vmatprep.subr.bf16.mxu0 %v2247
    %2381 = vmatpush1.bf16.msra.mxu0 %v2246
    %2382 = vmatprep.subr.bf16.mxu0 %v2245
    %2383 = vmatpush1.bf16.msra.mxu0 %v2244
    %2384 = vmatprep.subr.bf16.mxu0 %v2243
    %2385 = vmatpush1.bf16.msra.mxu0 %v2242
    %2386 = vmatprep.subr.bf16.mxu0 %v2273
    %2387 = vmatpush2.bf16.msra.mxu0 %v2272
    %2388 = vmatprep.subr.bf16.mxu0 %v2271
    %2389 = vmatpush2.bf16.msra.mxu0 %v2270
    %2390 = vmatprep.subr.bf16.mxu0 %v2269
    %2391 = vmatpush2.bf16.msra.mxu0 %v2268
    %2392 = vmatprep.subr.bf16.mxu0 %v2267
    %2393 = vmatpush2.bf16.msra.mxu0 %v2266
    %2394 = vmatprep.subr.bf16.mxu0 %v2265
    %2395 = vmatpush2.bf16.msra.mxu0 %v2264
    %2396 = vmatprep.subr.bf16.mxu0 %v2263
    %2397 = vmatpush2.bf16.msra.mxu0 %v2262
    %2398 = vmatprep.subr.bf16.mxu0 %v2261
    %2399 = vmatpush2.bf16.msra.mxu0 %v2260
    %2400 = vmatprep.subr.bf16.mxu0 %v2259
    %2401 = vmatpush2.bf16.msra.mxu0 %v2258
    %2402 = vmatprep.mubr.bf16.mxu0 %v1971
    %2403 = vmatmul.mubr.bf16.gmra.mxu0 %v1970
    %v2404 = vpop.f32.mrf.mxu0
    %v2405 = vadd.f32 %v2043, %v2404
    %v2406 = vpop.f32.mrf.mxu0
    %v2407 = vadd.f32 %v2047, %v2406
    %v2408 = vpop.f32.mrf.mxu0
    %v2409 = vadd.f32 %v2043, %v2408
    %v2410 = vpop.f32.mrf.mxu0
    %v2411 = vadd.f32 %v2047, %v2410
    %2412 = vdwg.mxu0
    %2413 = vmatprep.subr.bf16.mxu0 %v2289
    %2414 = vmatpush1.bf16.msra.mxu0 %v2288
    %2415 = vmatprep.subr.bf16.mxu0 %v2287
    %2416 = vmatpush1.bf16.msra.mxu0 %v2286
    %2417 = vmatprep.subr.bf16.mxu0 %v2285
    %2418 = vmatpush1.bf16.msra.mxu0 %v2284
    %2419 = vmatprep.subr.bf16.mxu0 %v2283
    %2420 = vmatpush1.bf16.msra.mxu0 %v2282
    %2421 = vmatprep.subr.bf16.mxu0 %v2281
    %2422 = vmatpush1.bf16.msra.mxu0 %v2280
    %2423 = vmatprep.subr.bf16.mxu0 %v2279
    %2424 = vmatpush1.bf16.msra.mxu0 %v2278
    %2425 = vmatprep.subr.bf16.mxu0 %v2277
    %2426 = vmatpush1.bf16.msra.mxu0 %v2276
    %2427 = vmatprep.subr.bf16.mxu0 %v2275
    %2428 = vmatpush1.bf16.msra.mxu0 %v2274
    %2429 = vmatprep.subr.bf16.mxu0 %v2305
    %2430 = vmatpush2.bf16.msra.mxu0 %v2304
    %2431 = vmatprep.subr.bf16.mxu0 %v2303
    %2432 = vmatpush2.bf16.msra.mxu0 %v2302
    %2433 = vmatprep.subr.bf16.mxu0 %v2301
    %2434 = vmatpush2.bf16.msra.mxu0 %v2300
    %2435 = vmatprep.subr.bf16.mxu0 %v2299
    %2436 = vmatpush2.bf16.msra.mxu0 %v2298
    %2437 = vmatprep.subr.bf16.mxu0 %v2297
    %2438 = vmatpush2.bf16.msra.mxu0 %v2296
    %2439 = vmatprep.subr.bf16.mxu0 %v2295
    %2440 = vmatpush2.bf16.msra.mxu0 %v2294
    %2441 = vmatprep.subr.bf16.mxu0 %v2293
    %2442 = vmatpush2.bf16.msra.mxu0 %v2292
    %2443 = vmatprep.subr.bf16.mxu0 %v2291
    %2444 = vmatpush2.bf16.msra.mxu0 %v2290
    %2445 = vmatprep.mubr.bf16.mxu0 %v1973
    %2446 = vmatmul.mubr.bf16.gmra.mxu0 %v1972
    %v2447 = vpop.f32.mrf.mxu0
    %v2448 = vadd.f32 %v2405, %v2447
    %v2449 = vpop.f32.mrf.mxu0
    %v2450 = vadd.f32 %v2407, %v2449
    %v2451 = vpop.f32.mrf.mxu0
    %v2452 = vadd.f32 %v2409, %v2451
    %v2453 = vpop.f32.mrf.mxu0
    %v2454 = vadd.f32 %v2411, %v2453
    %2455 = vdwg.mxu0
    %v2456 = vmax.f32 %v2448, 0.0
    %v2457 = vmax.f32 %v2450, 0.0
    %v2458 = vmax.f32 %v2452, 0.0
    %v2459 = vmax.f32 %v2454, 0.0
    %v2460 = vpack.c.bf16 %v2458, %v2456
    %v2461 = vpack.c.bf16 %v2459, %v2457
    %v2462 = vld [vmem:[%s5] sm:$0xf]
    %v2463 = vld [vmem:[%s5 + $0x4] sm:$0xf]
    %v2464 = vld [vmem:[%s5 + $0x8] sm:$0xf]
    %v2465 = vld [vmem:[%s5 + $0xc] sm:$0xf]
    %v2466 = vld [vmem:[%s5 + $0x10] sm:$0xf]
    %v2467 = vld [vmem:[%s5 + $0x14] sm:$0xf]
    %v2468 = vld [vmem:[%s5 + $0x18] sm:$0xf]
    %v2469 = vld [vmem:[%s5 + $0x1c] sm:$0xf]
    %v2470 = vld [vmem:[%s5 + $0x20] sm:$0xf]
    %v2471 = vld [vmem:[%s5 + $0x24] sm:$0xf]
    %v2472 = vld [vmem:[%s5 + $0x28] sm:$0xf]
    %v2473 = vld [vmem:[%s5 + $0x2c] sm:$0xf]
    %v2474 = vld [vmem:[%s5 + $0x30] sm:$0xf]
    %v2475 = vld [vmem:[%s5 + $0x34] sm:$0xf]
    %v2476 = vld [vmem:[%s5 + $0x38] sm:$0xf]
    %v2477 = vld [vmem:[%s5 + $0x3c] sm:$0xf]
    %v2478 = vld [vmem:[%s5 + $0x40] sm:$0xf]
    %v2479 = vld [vmem:[%s5 + $0x44] sm:$0xf]
    %v2480 = vld [vmem:[%s5 + $0x48] sm:$0xf]
    %v2481 = vld [vmem:[%s5 + $0x4c] sm:$0xf]
    %v2482 = vld [vmem:[%s5 + $0x50] sm:$0xf]
    %v2483 = vld [vmem:[%s5 + $0x54] sm:$0xf]
    %v2484 = vld [vmem:[%s5 + $0x58] sm:$0xf]
    %v2485 = vld [vmem:[%s5 + $0x5c] sm:$0xf]
    %v2486 = vld [vmem:[%s5 + $0x60] sm:$0xf]
    %v2487 = vld [vmem:[%s5 + $0x64] sm:$0xf]
    %v2488 = vld [vmem:[%s5 + $0x68] sm:$0xf]
    %v2489 = vld [vmem:[%s5 + $0x6c] sm:$0xf]
    %v2490 = vld [vmem:[%s5 + $0x70] sm:$0xf]
    %v2491 = vld [vmem:[%s5 + $0x74] sm:$0xf]
    %v2492 = vld [vmem:[%s5 + $0x78] sm:$0xf]
    %v2493 = vld [vmem:[%s5 + $0x7c] sm:$0xf]
    %v2494 = vld [vmem:[%s6] sm:$0x1]
    %v2496 = vlaneseq
    %v2497 = vshrl.u32 %v2496, 7
    %v2498 = vsub.s32 0, %v2497
    %v2499 = vrot.slane %v2494, %v2498
    %v2533 = vunpack.c.l.b16 %v2462
    %v2534 = vunpack.c.l.b16 %v2463
    %v2535 = vunpack.c.l.b16 %v2464
    %v2536 = vunpack.c.l.b16 %v2465
    %v2537 = vunpack.c.l.b16 %v2466
    %v2538 = vunpack.c.l.b16 %v2467
    %v2539 = vunpack.c.l.b16 %v2468
    %v2540 = vunpack.c.l.b16 %v2469
    %v2541 = vunpack.c.l.b16 %v2470
    %v2542 = vunpack.c.l.b16 %v2471
    %v2543 = vunpack.c.l.b16 %v2472
    %v2544 = vunpack.c.l.b16 %v2473
    %v2545 = vunpack.c.l.b16 %v2474
    %v2546 = vunpack.c.l.b16 %v2475
    %v2547 = vunpack.c.l.b16 %v2476
    %v2548 = vunpack.c.l.b16 %v2477
    %v2549 = vunpack.c.l.b16 %v2478
    %v2550 = vunpack.c.l.b16 %v2479
    %v2551 = vunpack.c.l.b16 %v2480
    %v2552 = vunpack.c.l.b16 %v2481
    %v2553 = vunpack.c.l.b16 %v2482
    %v2554 = vunpack.c.l.b16 %v2483
    %v2555 = vunpack.c.l.b16 %v2484
    %v2556 = vunpack.c.l.b16 %v2485
    %v2557 = vunpack.c.l.b16 %v2486
    %v2558 = vunpack.c.l.b16 %v2487
    %v2559 = vunpack.c.l.b16 %v2488
    %v2560 = vunpack.c.l.b16 %v2489
    %v2561 = vunpack.c.l.b16 %v2490
    %v2562 = vunpack.c.l.b16 %v2491
    %v2563 = vunpack.c.l.b16 %v2492
    %v2564 = vunpack.c.l.b16 %v2493
    %v2565 = vpack.c.b16 %v2534, %v2533
    %v2566 = vpack.c.b16 %v2536, %v2535
    %v2567 = vpack.c.b16 %v2538, %v2537
    %v2568 = vpack.c.b16 %v2540, %v2539
    %v2569 = vpack.c.b16 %v2542, %v2541
    %v2570 = vpack.c.b16 %v2544, %v2543
    %v2571 = vpack.c.b16 %v2546, %v2545
    %v2572 = vpack.c.b16 %v2548, %v2547
    %v2573 = vpack.c.b16 %v2550, %v2549
    %v2574 = vpack.c.b16 %v2552, %v2551
    %v2575 = vpack.c.b16 %v2554, %v2553
    %v2576 = vpack.c.b16 %v2556, %v2555
    %v2577 = vpack.c.b16 %v2558, %v2557
    %v2578 = vpack.c.b16 %v2560, %v2559
    %v2579 = vpack.c.b16 %v2562, %v2561
    %v2580 = vpack.c.b16 %v2564, %v2563
    %2597 = vmatprep.subr.bf16.mxu0 0
    %2598 = vmatpush1.bf16.msra.mxu0 %v2572
    %2599 = vmatprep.subr.bf16.mxu0 0
    %2600 = vmatpush1.bf16.msra.mxu0 %v2571
    %2601 = vmatprep.subr.bf16.mxu0 0
    %2602 = vmatpush1.bf16.msra.mxu0 %v2570
    %2603 = vmatprep.subr.bf16.mxu0 0
    %2604 = vmatpush1.bf16.msra.mxu0 %v2569
    %2605 = vmatprep.subr.bf16.mxu0 0
    %2606 = vmatpush1.bf16.msra.mxu0 %v2568
    %2607 = vmatprep.subr.bf16.mxu0 0
    %2608 = vmatpush1.bf16.msra.mxu0 %v2567
    %2609 = vmatprep.subr.bf16.mxu0 0
    %2610 = vmatpush1.bf16.msra.mxu0 %v2566
    %2611 = vmatprep.subr.bf16.mxu0 0
    %2612 = vmatpush1.bf16.msra.mxu0 %v2565
    %2613 = vmatprep.subr.bf16.mxu0 0
    %2614 = vmatpush2.bf16.msra.mxu0 %v2580
    %2615 = vmatprep.subr.bf16.mxu0 0
    %2616 = vmatpush2.bf16.msra.mxu0 %v2579
    %2617 = vmatprep.subr.bf16.mxu0 0
    %2618 = vmatpush2.bf16.msra.mxu0 %v2578
    %2619 = vmatprep.subr.bf16.mxu0 0
    %2620 = vmatpush2.bf16.msra.mxu0 %v2577
    %2621 = vmatprep.subr.bf16.mxu0 0
    %2622 = vmatpush2.bf16.msra.mxu0 %v2576
    %2623 = vmatprep.subr.bf16.mxu0 0
    %2624 = vmatpush2.bf16.msra.mxu0 %v2575
    %2625 = vmatprep.subr.bf16.mxu0 0
    %2626 = vmatpush2.bf16.msra.mxu0 %v2574
    %2627 = vmatprep.subr.bf16.mxu0 0
    %2628 = vmatpush2.bf16.msra.mxu0 %v2573
    %2629 = vmatprep.mubr.bf16.mxu0 %v2461
    %2630 = vmatmul.mubr.bf16.gmra.mxu0 %v2460
    %v2631 = vpop.f32.mrf.mxu0
    %v2632 = vadd.f32 %v2499, %v2631
    %v2633 = vpop.f32.mrf.mxu0
    %v2634 = vpop.f32.mrf.mxu0
    %v2635 = vadd.f32 %v2499, %v2634
    %v2636 = vpop.f32.mrf.mxu0
    %2637 = vdwg.mxu0
    %v2638 = vpack.c.bf16 %v2635, %v2632
    %v2640 = vunpack.c.l.b16 %v2638
    %v2641 = vunpack.c.h.b16 %v2638
    %v2642 = vpack.c.b16 %v2640, %v2640
    %v2643 = vpack.c.b16 %v2641, %v2641
    %2646 = vst [vmem:[%s7] sm:$0xf] %v2642
    %2647 = vst [vmem:[%s7 + $0x4] sm:$0xf] %v2643
    // Predicated region
    $region38: #{fc_rotation_forward.1} parent=1 // pred_check
      _
    $region39: #{fc_rotation_forward.1} parent=1 // pred_check_branch
      %2649 = sbr.rel (0) target = $region41
    $region40: #{fc_rotation_forward.1} parent=1 // pred_region
      _
    $region41: #{fc_rotation_forward.1} parent=1 // pred_fallthru
      _
    // Predicated region
    $region42: #{fc_rotation_forward.1} parent=1 // pred_check
      _
    $region43: #{fc_rotation_forward.1} parent=1 // pred_check_branch
      %2651 = sbr.rel (0) target = $region45
    $region44: #{fc_rotation_forward.1} parent=1 // pred_region
      _
    $region45: #{fc_rotation_forward.1} parent=1 // pred_fallthru
      _
    %2652 = vsyncpa [#allocation3], 1
    %2653 = vsyncpa [#allocation5], 1

</llo_original>
